<compile_context>
chip_gen: v5e
topology: v5e:2x2
jax: 0.10.0
libtpu: 0.0.40
codegen_flags: <defaults>
</compile_context>

<pallas_src>
import jax
import jax.numpy as jnp
from jax.experimental import pallas as pl
from jax.experimental.pallas import tpu as pltpu


def _scores_kernel(a_ref, b_ref, o_ref):
    # a_ref: (G, TS, D)  query rows of x185 for G heads
    # b_ref: (G, TN, D)  key rows of x190 for the same G heads
    # o_ref: (G, TS, TN) scores block
    s = jnp.einsum(
        "gqd,gkd->gqk",
        a_ref[...],
        b_ref[...],
        preferred_element_type=jnp.float32,
    )
    o_ref[...] = s.astype(o_ref.dtype)


def _divisors(n):
    return [d for d in range(1, n + 1) if n % d == 0]


def _pick_tiles(bh, s, d, in_dtype, out_dtype):
    """Jointly pick (G, TS, TN) and a matching vmem_limit_bytes."""
    in_item = jnp.dtype(in_dtype).itemsize
    out_item = jnp.dtype(out_dtype).itemsize

    # Per-generation VMEM capacity; conservative fallback (v7x = 64 MiB/TC).
    try:
        vmem_cap = int(pltpu.get_tpu_info().vmem_capacity_bytes)
    except Exception:
        vmem_cap = 64 * 1024 * 1024

    # Block budget: generous on 128-MiB parts (v5e/v6e), conservative on v7x.
    if vmem_cap >= 100 * 1024 * 1024:
        block_budget = 48 * 1024 * 1024
    else:
        block_budget = 24 * 1024 * 1024

    # Candidate tiles must divide the array dims and respect (8,128) layout:
    #  * TS: second-minor dim of a/out  -> multiple of 8 (or == S)
    #  * TN: minor dim of out           -> multiple of 128 (or == S)
    g_cands = _divisors(bh)
    ts_cands = sorted({t for t in _divisors(s) if t % 8 == 0} | {s})
    tn_cands = sorted({t for t in _divisors(s) if t % 128 == 0} | {s})

    MIN_STEPS = 8  # ~4 grid steps per TensorCore on v7x; plenty on v5e/v6e

    def footprint(g, ts, tn):
        # Double-buffered a/b/out blocks (+ f32 einsum temp if out is narrower).
        fp = 2 * (g * ts * d * in_item + g * tn * d * in_item
                  + g * ts * tn * out_item)
        if out_item < 4:
            fp += g * ts * tn * 4
        return fp

    best, best_key = None, None
    for g in g_cands:
        ng = bh // g
        for ts in ts_cands:
            for tn in tn_cands:
                fp = footprint(g, ts, tn)
                if fp > block_budget:
                    continue
                steps = ng * (s // ts) * (s // tn)
                key = (
                    steps >= MIN_STEPS,       # enough steps to pipeline DMA/compute/writeback
                    g * ts * tn * out_item,   # big, lane-dense writeback blocks (mem-bound)
                    tn == s,                  # avoid column tiling when it fits
                    ng % 2 == 0,              # even head-group count (v7x megacore balance)
                    g,                        # bigger b DMAs / fewer b re-fetches
                    steps,
                )
                if best_key is None or key > best_key:
                    best_key, best = key, (g, ts, tn, fp)

    if best is None:
        raise ValueError("No valid (G, TS, TN) tiling fits the VMEM budget.")

    g, ts, tn, fp = best
    vmem_limit = min(max(int(fp * 1.3) + (4 << 20), 32 << 20),
                     int(vmem_cap * 0.9))
    return g, ts, tn, vmem_limit


def transpose_matmul(x185, x190):
    """x185, x190: [B, H, S, D] -> [B, H, S, S] = x185 @ x190^T (last two dims)."""
    B, H, S, D = x185.shape
    assert x190.shape == (B, H, S, D)
    BH = B * H

    a = x185.reshape(BH, S, D)
    b = x190.reshape(BH, S, D)
    out_dtype = x185.dtype

    G, TS, TN, vmem_limit = _pick_tiles(BH, S, D, x185.dtype, out_dtype)
    assert BH % G == 0 and S % TS == 0 and S % TN == 0
    ng, nk, nq = BH // G, S // TN, S // TS

    in_item = jnp.dtype(x185.dtype).itemsize
    out_item = jnp.dtype(out_dtype).itemsize
    flops = 2 * BH * S * S * D
    # a is re-read once per key tile; b is resident across q; out written once.
    bytes_accessed = (nk * BH * S * D * in_item
                      + BH * S * D * in_item
                      + BH * S * S * out_item)

    out = pl.pallas_call(
        _scores_kernel,
        out_shape=jax.ShapeDtypeStruct((BH, S, S), out_dtype),
        grid_spec=pl.GridSpec(
            # q innermost so the q-invariant b block stays resident across q.
            grid=(ng, nk, nq),
            in_specs=[
                pl.BlockSpec((G, TS, D), lambda i, n, q: (i, q, 0)),
                pl.BlockSpec((G, TN, D), lambda i, n, q: (i, n, 0)),
            ],
            out_specs=pl.BlockSpec((G, TS, TN), lambda i, n, q: (i, q, n)),
        ),
        compiler_params=pltpu.CompilerParams(
            # Shard only head groups across TensorCores (preserves b reuse).
            dimension_semantics=("parallel", "arbitrary", "arbitrary"),
            vmem_limit_bytes=vmem_limit,
        ),
        cost_estimate=pl.CostEstimate(
            flops=flops, transcendentals=0, bytes_accessed=bytes_accessed
        ),
    )(a, b)
    return out.reshape(B, H, S, S)


def module_forward(x190, x185):
    """Mirrors M.forward(x190, x185) = matmul(x185, x190.transpose(-1, -2))."""
    return transpose_matmul(x185, x190)


if __name__ == "__main__":
    # Shapes from the original module: [1, 12, 384, 64].
    B, H, S, D = 1, 12, 384, 64
    key = jax.random.PRNGKey(0)
    k1, k2 = jax.random.split(key)
    x185 = jax.random.normal(k1, (B, H, S, D), dtype=jnp.float32)
    x190 = jax.random.normal(k2, (B, H, S, D), dtype=jnp.float32)

    out = module_forward(x190, x185)
    out = jax.block_until_ready(out)

    # Reference check (same semantics as torch.matmul + transpose(-1, -2)).
    ref = jnp.matmul(x185, jnp.swapaxes(x190, -1, -2))
    assert out.shape == (B, H, S, S)
    assert jnp.allclose(out, ref, atol=2e-3, rtol=2e-3)

    print("KERNEL_OK")
</pallas_src>

<mosaic_0001>
module attributes {stable_mosaic.version = 11 : i64} {
  func.func @_scores_kernel(%arg0: i32, %arg1: i32, %arg2: i32, %arg3: memref<6x96x64xf32, #tpu.memory_space<vmem>>, %arg4: memref<6x384x64xf32, #tpu.memory_space<vmem>>, %arg5: memref<6x96x384xf32, #tpu.memory_space<vmem>>) attributes {dimension_semantics = [#tpu.dimension_semantics<parallel>, #tpu.dimension_semantics<arbitrary>, #tpu.dimension_semantics<arbitrary>], iteration_bounds = array<i64: 2, 1, 4>, scalar_prefetch = 0 : i64, scratch_operands = 0 : i64, tpu.core_type = #tpu.core_type<tc>, window_params = [{transform_indices = @transform_0, window_bounds = array<i64: 6, 96, 64>}, {transform_indices = @transform_1, window_bounds = array<i64: 6, 384, 64>}, {transform_indices = @transform_2, window_bounds = array<i64: 6, 96, 384>}]} {
    %c0 = arith.constant 0 : index
    %c0_0 = arith.constant 0 : index
    %c0_1 = arith.constant 0 : index
    %0 = vector.load %arg3[%c0, %c0_0, %c0_1] : memref<6x96x64xf32, #tpu.memory_space<vmem>>, vector<6x96x64xf32>
    %c0_2 = arith.constant 0 : index
    %c0_3 = arith.constant 0 : index
    %c0_4 = arith.constant 0 : index
    %1 = vector.load %arg4[%c0_2, %c0_3, %c0_4] : memref<6x384x64xf32, #tpu.memory_space<vmem>>, vector<6x384x64xf32>
    "tpu.trace_start"() <{level = 10 : i32, message = "gqd,gkd->gqk"}> : () -> ()
    %cst = arith.constant dense<0.000000e+00> : vector<6x96x384xf32>
    %2 = tpu.matmul %0, %1, %cst {dimension_numbers = #tpu.dot_dimension_numbers<[2], [2], [1], [1], [0, 0, 0, 1, 1, 1], [0], [0]>} : vector<6x96x64xf32>, vector<6x384x64xf32>, vector<6x96x384xf32> -> vector<6x96x384xf32>
    "tpu.trace_stop"() : () -> ()
    %c0_5 = arith.constant 0 : index
    %c0_6 = arith.constant 0 : index
    %c0_7 = arith.constant 0 : index
    %3 = vector.load %arg5[%c0_5, %c0_6, %c0_7] : memref<6x96x384xf32, #tpu.memory_space<vmem>>, vector<6x96x384xf32>
    tpu.vector_store %arg5[%c0_5, %c0_6, %c0_7], %2 {strides = array<i32>} : memref<6x96x384xf32, #tpu.memory_space<vmem>>, vector<6x96x384xf32>,
    return
  }
  func.func @transform_0(%arg0: i32, %arg1: i32, %arg2: i32) -> (i32, i32, i32) {
    %c0_i32 = arith.constant 0 : i32
    %c0_i32_0 = arith.constant 0 : i32
    return %arg0, %arg2, %c0_i32 : i32, i32, i32
  }
  func.func @transform_1(%arg0: i32, %arg1: i32, %arg2: i32) -> (i32, i32, i32) {
    %c0_i32 = arith.constant 0 : i32
    %c0_i32_0 = arith.constant 0 : i32
    return %arg0, %arg1, %c0_i32 : i32, i32, i32
  }
  func.func @transform_2(%arg0: i32, %arg1: i32, %arg2: i32) -> (i32, i32, i32) {
    %c0_i32 = arith.constant 0 : i32
    return %arg0, %arg2, %arg1 : i32, i32, i32
  }
}

</mosaic_0001>

<llo_original>
// kernel: tpu_custom_call.1
$region0: #{tpu_custom_call.1}
  #allocation0 [shape = 'u32[]', space=smem, size = 0x4, offset = 0x4, fixed_abs, tag = 'smem constant byte address 0x4 - core index']
  #allocation1 [shape = 'u32[72,128]{1,0:T(1,128)}', space=vmem, size = 0x9000, scoped, tag = 'internal scratch']
  #allocation5 [shape = 's32[]', space=sflag, size = 0x4, offset = 0, fixed_abs, tag = 'sflag constant byte address 0x0 - dummy sync flag']
  %s0 = inlined_call_operand.vmem [shape: f32[12,384,64], index: 0, kind: input, shape index: {}]
  %s1 = inlined_call_operand.vmem [shape: f32[12,384,64], index: 1, kind: input, shape index: {}]
  %s2 = inlined_call_operand.hbm [shape: f32[12,384,384], index: 2, kind: output, shape index: {}]
  %s3 = sld [smem:[#allocation0]]
  $region79: #{tpu_custom_call.1} parent=0
    _
  %s5 = ssub.s32 1, %s3
  %s6 = scalar_select 0, %s5, %s3
  $region1: #{tpu_custom_call.1} parent=0
    #allocation2 [shape = 'u8[589824]{0}', space=vmem, size = 0x90000, scoped, tag = 'input window, operand 0']
    #allocation3 [shape = 'u8[1769472]{0}', space=vmem, size = 0x1b0000, scoped, tag = 'output window, operand 0']
    #allocation4 [shape = 's32[2]{0}', space=sflag, size = 0x8, scoped, tag = 'scoped memory for tpu_custom_call.1']
    %7 = vsyncpa [#allocation4], 0
    %s8 = scalar_lea.sflag [#allocation4], 1
    %9 = vsyncpa %s8, 0
    loop: start=0, step=1, limit=10
    $region2: #{tpu_custom_call.1} parent=1 // loop_pre_header
      _
    $region3: #{tpu_custom_call.1} parent=1 // loop_header
      %s11 = sphi 0, %s15
      %p12 = scmp.ge.s32.totalorder %s11, 10
      %s18 = sphi 0, %s37
      %s19 = sphi 0, %s33
      %s20 = sphi 0, %s29
      %s21 = sphi 0, %s18
      %s22 = sphi 0, %s19
      %s23 = sphi 0, %s20
      %s24 = sphi 0, %s21
      %s25 = sphi 0, %s22
      %s26 = sphi 0, %s23
      %s42 = sphi 0, %s44
      %s45 = sphi 0, %s42
      %s46 = sphi 0, %s45
      %s62 = sphi 0, %s46
      %s70 = sphi 0, %s72
      %s73 = sphi 0, %s70
      %s74 = sphi 0, %s73
      %s90 = sphi 0, %s74
      %s100 = sphi 0, %s102
      %s103 = sphi 0, %s100
      %s104 = sphi 0, %s103
      %s120 = sphi 0, %s104
    $region4: #{tpu_custom_call.1} parent=1 // loop_header_branch
      %14 = sbr.rel (%p12) target = $region8
    $region5: #{tpu_custom_call.1} parent=1 // loop_body
      %s16 = ssub.s32 %s11, 1
      %s17 = ssub.s32 %s11, 2
      %s27 = sadd.s32 1, %s20
      %p28 = scmp.ge.s32.totalorder %s27, 4
      %s29 = scalar_select %p28, 0, %s27
      %s30 = sadd.s32 1, %s19
      %s31 = scalar_select %p28, %s30, %s19
      %p32 = scmp.ge.s32.totalorder %s31, 1
      %s33 = scalar_select %p32, 0, %s31
      %s34 = sadd.s32 1, %s18
      %s35 = scalar_select %p32, %s34, %s18
      %p36 = scmp.ge.s32.totalorder %s35, 2
      %s37 = scalar_select %p36, 0, %s35
      %s38 = ssub.s32 %s18, %s37
      %s39 = ssub.s32 %s20, %s29
      %s40 = sor.u32 %s38, %s39
      %p41 = scmp.eq.s32.totalorder %s40, 0
      %s43 = sadd.s32 %s42, 1
      %s44 = scalar_select %p41, %s42, %s43
      %p47 = pneg %p41
      %p48 = scmp.eq.s32.totalorder %s11, 7
      %p49 = por %p47, %p48
      %p50 = scmp.ne.s32.totalorder %s42, %s45
      %p51 = scmp.eq.s32.totalorder %s11, 0
      %p52 = por %p50, %p51
      %p53 = scmp.ne.s32.totalorder %s42, %s45
      %p54 = scmp.eq.s32.totalorder %s16, 7
      %p55 = por %p53, %p54
      %p56 = scmp.ne.s32.totalorder %s45, %s46
      %p57 = scmp.eq.s32.totalorder %s16, 0
      %p58 = por %p56, %p57
      %p59 = scmp.ne.s32.totalorder %s45, %s46
      %p60 = scmp.eq.s32.totalorder %s17, 7
      %p61 = por %p59, %p60
      %p63 = scmp.ne.s32.totalorder %s46, %s62
      %p64 = scmp.eq.s32.totalorder %s17, 0
      %p65 = por %p63, %p64
      %s66 = ssub.s32 %s18, %s37
      %s67 = ssub.s32 %s19, %s33
      %s68 = sor.u32 %s66, %s67
      %p69 = scmp.eq.s32.totalorder %s68, 0
      %s71 = sadd.s32 %s70, 1
      %s72 = scalar_select %p69, %s70, %s71
      %p75 = pneg %p69
      %p76 = scmp.eq.s32.totalorder %s11, 7
      %p77 = por %p75, %p76
      %p78 = scmp.ne.s32.totalorder %s70, %s73
      %p79 = scmp.eq.s32.totalorder %s11, 0
      %p80 = por %p78, %p79
      %p81 = scmp.ne.s32.totalorder %s70, %s73
      %p82 = scmp.eq.s32.totalorder %s16, 7
      %p83 = por %p81, %p82
      %p84 = scmp.ne.s32.totalorder %s73, %s74
      %p85 = scmp.eq.s32.totalorder %s16, 0
      %p86 = por %p84, %p85
      %p87 = scmp.ne.s32.totalorder %s73, %s74
      %p88 = scmp.eq.s32.totalorder %s17, 7
      %p89 = por %p87, %p88
      %p91 = scmp.ne.s32.totalorder %s74, %s90
      %p92 = scmp.eq.s32.totalorder %s17, 0
      %p93 = por %p91, %p92
      %s94 = ssub.s32 %s18, %s37
      %s95 = ssub.s32 %s20, %s29
      %s96 = sor.u32 %s94, %s95
      %s97 = ssub.s32 %s19, %s33
      %s98 = sor.u32 %s96, %s97
      %p99 = scmp.eq.s32.totalorder %s98, 0
      %s101 = sadd.s32 %s100, 1
      %s102 = scalar_select %p99, %s100, %s101
      %p105 = pneg %p99
      %p106 = scmp.eq.s32.totalorder %s11, 7
      %p107 = por %p105, %p106
      %p108 = scmp.ne.s32.totalorder %s100, %s103
      %p109 = scmp.eq.s32.totalorder %s11, 0
      %p110 = por %p108, %p109
      %p111 = scmp.ne.s32.totalorder %s100, %s103
      %p112 = scmp.eq.s32.totalorder %s16, 7
      %p113 = por %p111, %p112
      %p114 = scmp.ne.s32.totalorder %s103, %s104
      %p115 = scmp.eq.s32.totalorder %s16, 0
      %p116 = por %p114, %p115
      %p117 = scmp.ne.s32.totalorder %s103, %s104
      %p118 = scmp.eq.s32.totalorder %s17, 7
      %p119 = por %p117, %p118
      %p121 = scmp.ne.s32.totalorder %s104, %s120
      %p122 = scmp.eq.s32.totalorder %s17, 0
      %p123 = por %p121, %p122
      %p124 = scmp.le.s32.totalorder 1, %s11
      %p125 = scmp.lt.s32.totalorder %s11, 9
      %p126 = pnand %p124, %p125
      %p127 = pneg %p126
      // Predicated region
      $region9: #{tpu_custom_call.1} parent=5 // pred_check
        _
      $region10: #{tpu_custom_call.1} parent=5 // pred_check_branch
        %129 = sbr.rel (%p126) target = $region12
      $region11: #{tpu_custom_call.1} parent=5 // pred_region
        %s130 = ssub.s32 %s11, 1
      $region12: #{tpu_custom_call.1} parent=5 // pred_fallthru
        _
      %p131 = scmp.lt.s32.totalorder %s11, 8
      // Predicated region
      $region13: #{tpu_custom_call.1} parent=5 // pred_check
        %p132 = pneg %p131
      $region14: #{tpu_custom_call.1} parent=5 // pred_check_branch
        %134 = sbr.rel (%p132) target = $region16
      $region15: #{tpu_custom_call.1} parent=5 // pred_region
        // Predicated region
        $region17: #{tpu_custom_call.1} parent=15 // pred_check
          %p135 = pneg %p52
        $region18: #{tpu_custom_call.1} parent=15 // pred_check_branch
          %137 = sbr.rel (%p135) target = $region20
        $region19: #{tpu_custom_call.1} parent=15 // pred_region
          %s138 = sand.u32 %s42, 1
          %s139 = sand.u32 %s42, 1
          %s140 = smul.addr %s139, 576
          %s141 = scalar_lea.vmem [#allocation2], %s140
          %s142 = smul.u32 6, %s18
          %s143 = smul.u32 12, %s20
          %s144 = smul.addr %s142, 48
          %s145 = sadd.s32 %s143, %s144
          %s146 = smul.addr %s145, 8
          %s147 = scalar_lea.vmem %s0, %s146
          // Predicated region
          $region21: #{tpu_custom_call.1} parent=19 // pred_check
            _
          $region22: #{tpu_custom_call.1} parent=19 // pred_check_branch
            %149 = sbr.rel (0) target = $region24
          $region23: #{tpu_custom_call.1} parent=19 // pred_region
            // Predicated region
            $region25: #{tpu_custom_call.1} parent=23 // pred_check
              _
            $region26: #{tpu_custom_call.1} parent=23 // pred_check_branch
              %151 = sbr.rel (0) target = $region28
            $region27: #{tpu_custom_call.1} parent=23 // pred_region
              // Predicated region
              $region40: #{tpu_custom_call.1} parent=27 // pred_check
                _
              $region41: #{tpu_custom_call.1} parent=27 // pred_check_branch
                %309 = sbr.rel (0) target = $region43
              $region42: #{tpu_custom_call.1} parent=27 // pred_region
                loop: start=0, step=1, limit=1
                $region44: #{tpu_custom_call.1} parent=42 // loop_pre_header
                  _
                $region45: #{tpu_custom_call.1} parent=42 // loop_header
                  %s311 = sphi 0, %s315
                  %p312 = scmp.ge.s32.totalorder %s311, 1
                  %s316 = sphi %s147, %s147
                  %s317 = sphi %s141, %s141
                $region46: #{tpu_custom_call.1} parent=42 // loop_header_branch
                  %314 = sbr.rel (%p312) target = $region50
                $region47: #{tpu_custom_call.1} parent=42 // loop_body
                  %v318 = vld [vmem:[%s316] sm:$0xff]
                  %319 = vst [vmem:[%s317] sm:$0xff] %v318
                  %v320 = vld [vmem:[%s316 + $0x8] sm:$0xff]
                  %321 = vst [vmem:[%s317 + $0x8] sm:$0xff] %v320
                  %v322 = vld [vmem:[%s316 + $0x10] sm:$0xff]
                  %323 = vst [vmem:[%s317 + $0x10] sm:$0xff] %v322
                  %v324 = vld [vmem:[%s316 + $0x18] sm:$0xff]
                  %325 = vst [vmem:[%s317 + $0x18] sm:$0xff] %v324
                  %v326 = vld [vmem:[%s316 + $0x20] sm:$0xff]
                  %327 = vst [vmem:[%s317 + $0x20] sm:$0xff] %v326
                  %v328 = vld [vmem:[%s316 + $0x28] sm:$0xff]
                  %329 = vst [vmem:[%s317 + $0x28] sm:$0xff] %v328
                  %v330 = vld [vmem:[%s316 + $0x30] sm:$0xff]
                  %331 = vst [vmem:[%s317 + $0x30] sm:$0xff] %v330
                  %v332 = vld [vmem:[%s316 + $0x38] sm:$0xff]
                  %333 = vst [vmem:[%s317 + $0x38] sm:$0xff] %v332
                  %v334 = vld [vmem:[%s316 + $0x40] sm:$0xff]
                  %335 = vst [vmem:[%s317 + $0x40] sm:$0xff] %v334
                  %v336 = vld [vmem:[%s316 + $0x48] sm:$0xff]
                  %337 = vst [vmem:[%s317 + $0x48] sm:$0xff] %v336
                  %v338 = vld [vmem:[%s316 + $0x50] sm:$0xff]
                  %339 = vst [vmem:[%s317 + $0x50] sm:$0xff] %v338
                  %v340 = vld [vmem:[%s316 + $0x58] sm:$0xff]
                  %341 = vst [vmem:[%s317 + $0x58] sm:$0xff] %v340
                  %v342 = vld [vmem:[%s316 + $0x180] sm:$0xff]
                  %343 = vst [vmem:[%s317 + $0x60] sm:$0xff] %v342
                  %v344 = vld [vmem:[%s316 + $0x188] sm:$0xff]
                  %345 = vst [vmem:[%s317 + $0x68] sm:$0xff] %v344
                  %v346 = vld [vmem:[%s316 + $0x190] sm:$0xff]
                  %347 = vst [vmem:[%s317 + $0x70] sm:$0xff] %v346
                  %v348 = vld [vmem:[%s316 + $0x198] sm:$0xff]
                  %349 = vst [vmem:[%s317 + $0x78] sm:$0xff] %v348
                  %v350 = vld [vmem:[%s316 + $0x1a0] sm:$0xff]
                  %351 = vst [vmem:[%s317 + $0x80] sm:$0xff] %v350
                  %v352 = vld [vmem:[%s316 + $0x1a8] sm:$0xff]
                  %353 = vst [vmem:[%s317 + $0x88] sm:$0xff] %v352
                  %v354 = vld [vmem:[%s316 + $0x1b0] sm:$0xff]
                  %355 = vst [vmem:[%s317 + $0x90] sm:$0xff] %v354
                  %v356 = vld [vmem:[%s316 + $0x1b8] sm:$0xff]
                  %357 = vst [vmem:[%s317 + $0x98] sm:$0xff] %v356
                  %v358 = vld [vmem:[%s316 + $0x1c0] sm:$0xff]
                  %359 = vst [vmem:[%s317 + $0xa0] sm:$0xff] %v358
                  %v360 = vld [vmem:[%s316 + $0x1c8] sm:$0xff]
                  %361 = vst [vmem:[%s317 + $0xa8] sm:$0xff] %v360
                  %v362 = vld [vmem:[%s316 + $0x1d0] sm:$0xff]
                  %363 = vst [vmem:[%s317 + $0xb0] sm:$0xff] %v362
                  %v364 = vld [vmem:[%s316 + $0x1d8] sm:$0xff]
                  %365 = vst [vmem:[%s317 + $0xb8] sm:$0xff] %v364
                  %v366 = vld [vmem:[%s316 + $0x300] sm:$0xff]
                  %367 = vst [vmem:[%s317 + $0xc0] sm:$0xff] %v366
                  %v368 = vld [vmem:[%s316 + $0x308] sm:$0xff]
                  %369 = vst [vmem:[%s317 + $0xc8] sm:$0xff] %v368
                  %v370 = vld [vmem:[%s316 + $0x310] sm:$0xff]
                  %371 = vst [vmem:[%s317 + $0xd0] sm:$0xff] %v370
                  %v372 = vld [vmem:[%s316 + $0x318] sm:$0xff]
                  %373 = vst [vmem:[%s317 + $0xd8] sm:$0xff] %v372
                  %v374 = vld [vmem:[%s316 + $0x320] sm:$0xff]
                  %375 = vst [vmem:[%s317 + $0xe0] sm:$0xff] %v374
                  %v376 = vld [vmem:[%s316 + $0x328] sm:$0xff]
                  %377 = vst [vmem:[%s317 + $0xe8] sm:$0xff] %v376
                  %v378 = vld [vmem:[%s316 + $0x330] sm:$0xff]
                  %379 = vst [vmem:[%s317 + $0xf0] sm:$0xff] %v378
                  %v380 = vld [vmem:[%s316 + $0x338] sm:$0xff]
                  %381 = vst [vmem:[%s317 + $0xf8] sm:$0xff] %v380
                  %v382 = vld [vmem:[%s316 + $0x340] sm:$0xff]
                  %383 = vst [vmem:[%s317 + $0x100] sm:$0xff] %v382
                  %v384 = vld [vmem:[%s316 + $0x348] sm:$0xff]
                  %385 = vst [vmem:[%s317 + $0x108] sm:$0xff] %v384
                  %v386 = vld [vmem:[%s316 + $0x350] sm:$0xff]
                  %387 = vst [vmem:[%s317 + $0x110] sm:$0xff] %v386
                  %v388 = vld [vmem:[%s316 + $0x358] sm:$0xff]
                  %389 = vst [vmem:[%s317 + $0x118] sm:$0xff] %v388
                  %v390 = vld [vmem:[%s316 + $0x480] sm:$0xff]
                  %391 = vst [vmem:[%s317 + $0x120] sm:$0xff] %v390
                  %v392 = vld [vmem:[%s316 + $0x488] sm:$0xff]
                  %393 = vst [vmem:[%s317 + $0x128] sm:$0xff] %v392
                  %v394 = vld [vmem:[%s316 + $0x490] sm:$0xff]
                  %395 = vst [vmem:[%s317 + $0x130] sm:$0xff] %v394
                  %v396 = vld [vmem:[%s316 + $0x498] sm:$0xff]
                  %397 = vst [vmem:[%s317 + $0x138] sm:$0xff] %v396
                  %v398 = vld [vmem:[%s316 + $0x4a0] sm:$0xff]
                  %399 = vst [vmem:[%s317 + $0x140] sm:$0xff] %v398
                  %v400 = vld [vmem:[%s316 + $0x4a8] sm:$0xff]
                  %401 = vst [vmem:[%s317 + $0x148] sm:$0xff] %v400
                  %v402 = vld [vmem:[%s316 + $0x4b0] sm:$0xff]
                  %403 = vst [vmem:[%s317 + $0x150] sm:$0xff] %v402
                  %v404 = vld [vmem:[%s316 + $0x4b8] sm:$0xff]
                  %405 = vst [vmem:[%s317 + $0x158] sm:$0xff] %v404
                  %v406 = vld [vmem:[%s316 + $0x4c0] sm:$0xff]
                  %407 = vst [vmem:[%s317 + $0x160] sm:$0xff] %v406
                  %v408 = vld [vmem:[%s316 + $0x4c8] sm:$0xff]
                  %409 = vst [vmem:[%s317 + $0x168] sm:$0xff] %v408
                  %v410 = vld [vmem:[%s316 + $0x4d0] sm:$0xff]
                  %411 = vst [vmem:[%s317 + $0x170] sm:$0xff] %v410
                  %v412 = vld [vmem:[%s316 + $0x4d8] sm:$0xff]
                  %413 = vst [vmem:[%s317 + $0x178] sm:$0xff] %v412
                  %v414 = vld [vmem:[%s316 + $0x600] sm:$0xff]
                  %415 = vst [vmem:[%s317 + $0x180] sm:$0xff] %v414
                  %v416 = vld [vmem:[%s316 + $0x608] sm:$0xff]
                  %417 = vst [vmem:[%s317 + $0x188] sm:$0xff] %v416
                  %v418 = vld [vmem:[%s316 + $0x610] sm:$0xff]
                  %419 = vst [vmem:[%s317 + $0x190] sm:$0xff] %v418
                  %v420 = vld [vmem:[%s316 + $0x618] sm:$0xff]
                  %421 = vst [vmem:[%s317 + $0x198] sm:$0xff] %v420
                  %v422 = vld [vmem:[%s316 + $0x620] sm:$0xff]
                  %423 = vst [vmem:[%s317 + $0x1a0] sm:$0xff] %v422
                  %v424 = vld [vmem:[%s316 + $0x628] sm:$0xff]
                  %425 = vst [vmem:[%s317 + $0x1a8] sm:$0xff] %v424
                  %v426 = vld [vmem:[%s316 + $0x630] sm:$0xff]
                  %427 = vst [vmem:[%s317 + $0x1b0] sm:$0xff] %v426
                  %v428 = vld [vmem:[%s316 + $0x638] sm:$0xff]
                  %429 = vst [vmem:[%s317 + $0x1b8] sm:$0xff] %v428
                  %v430 = vld [vmem:[%s316 + $0x640] sm:$0xff]
                  %431 = vst [vmem:[%s317 + $0x1c0] sm:$0xff] %v430
                  %v432 = vld [vmem:[%s316 + $0x648] sm:$0xff]
                  %433 = vst [vmem:[%s317 + $0x1c8] sm:$0xff] %v432
                  %v434 = vld [vmem:[%s316 + $0x650] sm:$0xff]
                  %435 = vst [vmem:[%s317 + $0x1d0] sm:$0xff] %v434
                  %v436 = vld [vmem:[%s316 + $0x658] sm:$0xff]
                  %437 = vst [vmem:[%s317 + $0x1d8] sm:$0xff] %v436
                  %v438 = vld [vmem:[%s316 + $0x780] sm:$0xff]
                  %439 = vst [vmem:[%s317 + $0x1e0] sm:$0xff] %v438
                  %v440 = vld [vmem:[%s316 + $0x788] sm:$0xff]
                  %441 = vst [vmem:[%s317 + $0x1e8] sm:$0xff] %v440
                  %v442 = vld [vmem:[%s316 + $0x790] sm:$0xff]
                  %443 = vst [vmem:[%s317 + $0x1f0] sm:$0xff] %v442
                  %v444 = vld [vmem:[%s316 + $0x798] sm:$0xff]
                  %445 = vst [vmem:[%s317 + $0x1f8] sm:$0xff] %v444
                  %v446 = vld [vmem:[%s316 + $0x7a0] sm:$0xff]
                  %447 = vst [vmem:[%s317 + $0x200] sm:$0xff] %v446
                  %v448 = vld [vmem:[%s316 + $0x7a8] sm:$0xff]
                  %449 = vst [vmem:[%s317 + $0x208] sm:$0xff] %v448
                  %v450 = vld [vmem:[%s316 + $0x7b0] sm:$0xff]
                  %451 = vst [vmem:[%s317 + $0x210] sm:$0xff] %v450
                  %v452 = vld [vmem:[%s316 + $0x7b8] sm:$0xff]
                  %453 = vst [vmem:[%s317 + $0x218] sm:$0xff] %v452
                  %v454 = vld [vmem:[%s316 + $0x7c0] sm:$0xff]
                  %455 = vst [vmem:[%s317 + $0x220] sm:$0xff] %v454
                  %v456 = vld [vmem:[%s316 + $0x7c8] sm:$0xff]
                  %457 = vst [vmem:[%s317 + $0x228] sm:$0xff] %v456
                  %v458 = vld [vmem:[%s316 + $0x7d0] sm:$0xff]
                  %459 = vst [vmem:[%s317 + $0x230] sm:$0xff] %v458
                  %v460 = vld [vmem:[%s316 + $0x7d8] sm:$0xff]
                  %461 = vst [vmem:[%s317 + $0x238] sm:$0xff] %v460
                $region48: #{tpu_custom_call.1} parent=42 // loop_footer
                  %s315 = sadd.s32 1, %s311
                $region49: #{tpu_custom_call.1} parent=42 // loop_footer_branch
                  %310 = sbr.rel target = $region45
                $region50: #{tpu_custom_call.1} parent=42 // loop_exit
                  _
              $region43: #{tpu_custom_call.1} parent=27 // pred_fallthru
                _
              // Predicated region
              $region51: #{tpu_custom_call.1} parent=27 // pred_check
                _
              $region52: #{tpu_custom_call.1} parent=27 // pred_check_branch
                %463 = sbr.rel target = $region54
              $region53: #{tpu_custom_call.1} parent=27 // pred_region
                _
              $region54: #{tpu_custom_call.1} parent=27 // pred_fallthru
                _
            $region28: #{tpu_custom_call.1} parent=23 // pred_fallthru
              _
            // Predicated region
            $region29: #{tpu_custom_call.1} parent=23 // pred_check
              _
            $region30: #{tpu_custom_call.1} parent=23 // pred_check_branch
              %153 = sbr.rel target = $region32
            $region31: #{tpu_custom_call.1} parent=23 // pred_region
              %s155 = ssub.s32 256, 1
              loop: start=0, step=1, limit=1
              $region33: #{tpu_custom_call.1} parent=31 // loop_pre_header
                _
              $region34: #{tpu_custom_call.1} parent=31 // loop_header
                %s157 = sphi 0, %s161
                %p158 = scmp.ge.s32.totalorder %s157, 1
                %s162 = sphi %s147, %s147
                %s163 = sphi %s141, %s141
              $region35: #{tpu_custom_call.1} parent=31 // loop_header_branch
                %160 = sbr.rel (%p158) target = $region39
              $region36: #{tpu_custom_call.1} parent=31 // loop_body
                %v164 = vld [vmem:[%s162] sm:%s155]
                %165 = vst [vmem:[%s163] sm:%s155] %v164
                %v166 = vld [vmem:[%s162 + $0x8] sm:%s155]
                %167 = vst [vmem:[%s163 + $0x8] sm:%s155] %v166
                %v168 = vld [vmem:[%s162 + $0x10] sm:%s155]
                %169 = vst [vmem:[%s163 + $0x10] sm:%s155] %v168
                %v170 = vld [vmem:[%s162 + $0x18] sm:%s155]
                %171 = vst [vmem:[%s163 + $0x18] sm:%s155] %v170
                %v172 = vld [vmem:[%s162 + $0x20] sm:%s155]
                %173 = vst [vmem:[%s163 + $0x20] sm:%s155] %v172
                %v174 = vld [vmem:[%s162 + $0x28] sm:%s155]
                %175 = vst [vmem:[%s163 + $0x28] sm:%s155] %v174
                %v176 = vld [vmem:[%s162 + $0x30] sm:%s155]
                %177 = vst [vmem:[%s163 + $0x30] sm:%s155] %v176
                %v178 = vld [vmem:[%s162 + $0x38] sm:%s155]
                %179 = vst [vmem:[%s163 + $0x38] sm:%s155] %v178
                %v180 = vld [vmem:[%s162 + $0x40] sm:%s155]
                %181 = vst [vmem:[%s163 + $0x40] sm:%s155] %v180
                %v182 = vld [vmem:[%s162 + $0x48] sm:%s155]
                %183 = vst [vmem:[%s163 + $0x48] sm:%s155] %v182
                %v184 = vld [vmem:[%s162 + $0x50] sm:%s155]
                %185 = vst [vmem:[%s163 + $0x50] sm:%s155] %v184
                %v186 = vld [vmem:[%s162 + $0x58] sm:%s155]
                %187 = vst [vmem:[%s163 + $0x58] sm:%s155] %v186
                %v188 = vld [vmem:[%s162 + $0x180] sm:%s155]
                %189 = vst [vmem:[%s163 + $0x60] sm:%s155] %v188
                %v190 = vld [vmem:[%s162 + $0x188] sm:%s155]
                %191 = vst [vmem:[%s163 + $0x68] sm:%s155] %v190
                %v192 = vld [vmem:[%s162 + $0x190] sm:%s155]
                %193 = vst [vmem:[%s163 + $0x70] sm:%s155] %v192
                %v194 = vld [vmem:[%s162 + $0x198] sm:%s155]
                %195 = vst [vmem:[%s163 + $0x78] sm:%s155] %v194
                %v196 = vld [vmem:[%s162 + $0x1a0] sm:%s155]
                %197 = vst [vmem:[%s163 + $0x80] sm:%s155] %v196
                %v198 = vld [vmem:[%s162 + $0x1a8] sm:%s155]
                %199 = vst [vmem:[%s163 + $0x88] sm:%s155] %v198
                %v200 = vld [vmem:[%s162 + $0x1b0] sm:%s155]
                %201 = vst [vmem:[%s163 + $0x90] sm:%s155] %v200
                %v202 = vld [vmem:[%s162 + $0x1b8] sm:%s155]
                %203 = vst [vmem:[%s163 + $0x98] sm:%s155] %v202
                %v204 = vld [vmem:[%s162 + $0x1c0] sm:%s155]
                %205 = vst [vmem:[%s163 + $0xa0] sm:%s155] %v204
                %v206 = vld [vmem:[%s162 + $0x1c8] sm:%s155]
                %207 = vst [vmem:[%s163 + $0xa8] sm:%s155] %v206
                %v208 = vld [vmem:[%s162 + $0x1d0] sm:%s155]
                %209 = vst [vmem:[%s163 + $0xb0] sm:%s155] %v208
                %v210 = vld [vmem:[%s162 + $0x1d8] sm:%s155]
                %211 = vst [vmem:[%s163 + $0xb8] sm:%s155] %v210
                %v212 = vld [vmem:[%s162 + $0x300] sm:%s155]
                %213 = vst [vmem:[%s163 + $0xc0] sm:%s155] %v212
                %v214 = vld [vmem:[%s162 + $0x308] sm:%s155]
                %215 = vst [vmem:[%s163 + $0xc8] sm:%s155] %v214
                %v216 = vld [vmem:[%s162 + $0x310] sm:%s155]
                %217 = vst [vmem:[%s163 + $0xd0] sm:%s155] %v216
                %v218 = vld [vmem:[%s162 + $0x318] sm:%s155]
                %219 = vst [vmem:[%s163 + $0xd8] sm:%s155] %v218
                %v220 = vld [vmem:[%s162 + $0x320] sm:%s155]
                %221 = vst [vmem:[%s163 + $0xe0] sm:%s155] %v220
                %v222 = vld [vmem:[%s162 + $0x328] sm:%s155]
                %223 = vst [vmem:[%s163 + $0xe8] sm:%s155] %v222
                %v224 = vld [vmem:[%s162 + $0x330] sm:%s155]
                %225 = vst [vmem:[%s163 + $0xf0] sm:%s155] %v224
                %v226 = vld [vmem:[%s162 + $0x338] sm:%s155]
                %227 = vst [vmem:[%s163 + $0xf8] sm:%s155] %v226
                %v228 = vld [vmem:[%s162 + $0x340] sm:%s155]
                %229 = vst [vmem:[%s163 + $0x100] sm:%s155] %v228
                %v230 = vld [vmem:[%s162 + $0x348] sm:%s155]
                %231 = vst [vmem:[%s163 + $0x108] sm:%s155] %v230
                %v232 = vld [vmem:[%s162 + $0x350] sm:%s155]
                %233 = vst [vmem:[%s163 + $0x110] sm:%s155] %v232
                %v234 = vld [vmem:[%s162 + $0x358] sm:%s155]
                %235 = vst [vmem:[%s163 + $0x118] sm:%s155] %v234
                %v236 = vld [vmem:[%s162 + $0x480] sm:%s155]
                %237 = vst [vmem:[%s163 + $0x120] sm:%s155] %v236
                %v238 = vld [vmem:[%s162 + $0x488] sm:%s155]
                %239 = vst [vmem:[%s163 + $0x128] sm:%s155] %v238
                %v240 = vld [vmem:[%s162 + $0x490] sm:%s155]
                %241 = vst [vmem:[%s163 + $0x130] sm:%s155] %v240
                %v242 = vld [vmem:[%s162 + $0x498] sm:%s155]
                %243 = vst [vmem:[%s163 + $0x138] sm:%s155] %v242
                %v244 = vld [vmem:[%s162 + $0x4a0] sm:%s155]
                %245 = vst [vmem:[%s163 + $0x140] sm:%s155] %v244
                %v246 = vld [vmem:[%s162 + $0x4a8] sm:%s155]
                %247 = vst [vmem:[%s163 + $0x148] sm:%s155] %v246
                %v248 = vld [vmem:[%s162 + $0x4b0] sm:%s155]
                %249 = vst [vmem:[%s163 + $0x150] sm:%s155] %v248
                %v250 = vld [vmem:[%s162 + $0x4b8] sm:%s155]
                %251 = vst [vmem:[%s163 + $0x158] sm:%s155] %v250
                %v252 = vld [vmem:[%s162 + $0x4c0] sm:%s155]
                %253 = vst [vmem:[%s163 + $0x160] sm:%s155] %v252
                %v254 = vld [vmem:[%s162 + $0x4c8] sm:%s155]
                %255 = vst [vmem:[%s163 + $0x168] sm:%s155] %v254
                %v256 = vld [vmem:[%s162 + $0x4d0] sm:%s155]
                %257 = vst [vmem:[%s163 + $0x170] sm:%s155] %v256
                %v258 = vld [vmem:[%s162 + $0x4d8] sm:%s155]
                %259 = vst [vmem:[%s163 + $0x178] sm:%s155] %v258
                %v260 = vld [vmem:[%s162 + $0x600] sm:%s155]
                %261 = vst [vmem:[%s163 + $0x180] sm:%s155] %v260
                %v262 = vld [vmem:[%s162 + $0x608] sm:%s155]
                %263 = vst [vmem:[%s163 + $0x188] sm:%s155] %v262
                %v264 = vld [vmem:[%s162 + $0x610] sm:%s155]
                %265 = vst [vmem:[%s163 + $0x190] sm:%s155] %v264
                %v266 = vld [vmem:[%s162 + $0x618] sm:%s155]
                %267 = vst [vmem:[%s163 + $0x198] sm:%s155] %v266
                %v268 = vld [vmem:[%s162 + $0x620] sm:%s155]
                %269 = vst [vmem:[%s163 + $0x1a0] sm:%s155] %v268
                %v270 = vld [vmem:[%s162 + $0x628] sm:%s155]
                %271 = vst [vmem:[%s163 + $0x1a8] sm:%s155] %v270
                %v272 = vld [vmem:[%s162 + $0x630] sm:%s155]
                %273 = vst [vmem:[%s163 + $0x1b0] sm:%s155] %v272
                %v274 = vld [vmem:[%s162 + $0x638] sm:%s155]
                %275 = vst [vmem:[%s163 + $0x1b8] sm:%s155] %v274
                %v276 = vld [vmem:[%s162 + $0x640] sm:%s155]
                %277 = vst [vmem:[%s163 + $0x1c0] sm:%s155] %v276
                %v278 = vld [vmem:[%s162 + $0x648] sm:%s155]
                %279 = vst [vmem:[%s163 + $0x1c8] sm:%s155] %v278
                %v280 = vld [vmem:[%s162 + $0x650] sm:%s155]
                %281 = vst [vmem:[%s163 + $0x1d0] sm:%s155] %v280
                %v282 = vld [vmem:[%s162 + $0x658] sm:%s155]
                %283 = vst [vmem:[%s163 + $0x1d8] sm:%s155] %v282
                %v284 = vld [vmem:[%s162 + $0x780] sm:%s155]
                %285 = vst [vmem:[%s163 + $0x1e0] sm:%s155] %v284
                %v286 = vld [vmem:[%s162 + $0x788] sm:%s155]
                %287 = vst [vmem:[%s163 + $0x1e8] sm:%s155] %v286
                %v288 = vld [vmem:[%s162 + $0x790] sm:%s155]
                %289 = vst [vmem:[%s163 + $0x1f0] sm:%s155] %v288
                %v290 = vld [vmem:[%s162 + $0x798] sm:%s155]
                %291 = vst [vmem:[%s163 + $0x1f8] sm:%s155] %v290
                %v292 = vld [vmem:[%s162 + $0x7a0] sm:%s155]
                %293 = vst [vmem:[%s163 + $0x200] sm:%s155] %v292
                %v294 = vld [vmem:[%s162 + $0x7a8] sm:%s155]
                %295 = vst [vmem:[%s163 + $0x208] sm:%s155] %v294
                %v296 = vld [vmem:[%s162 + $0x7b0] sm:%s155]
                %297 = vst [vmem:[%s163 + $0x210] sm:%s155] %v296
                %v298 = vld [vmem:[%s162 + $0x7b8] sm:%s155]
                %299 = vst [vmem:[%s163 + $0x218] sm:%s155] %v298
                %v300 = vld [vmem:[%s162 + $0x7c0] sm:%s155]
                %301 = vst [vmem:[%s163 + $0x220] sm:%s155] %v300
                %v302 = vld [vmem:[%s162 + $0x7c8] sm:%s155]
                %303 = vst [vmem:[%s163 + $0x228] sm:%s155] %v302
                %v304 = vld [vmem:[%s162 + $0x7d0] sm:%s155]
                %305 = vst [vmem:[%s163 + $0x230] sm:%s155] %v304
                %v306 = vld [vmem:[%s162 + $0x7d8] sm:%s155]
                %307 = vst [vmem:[%s163 + $0x238] sm:%s155] %v306
              $region37: #{tpu_custom_call.1} parent=31 // loop_footer
                %s161 = sadd.s32 1, %s157
              $region38: #{tpu_custom_call.1} parent=31 // loop_footer_branch
                %156 = sbr.rel target = $region34
              $region39: #{tpu_custom_call.1} parent=31 // loop_exit
                _
            $region32: #{tpu_custom_call.1} parent=23 // pred_fallthru
              _
          $region24: #{tpu_custom_call.1} parent=19 // pred_fallthru
            _
          %464 = vnop
        $region20: #{tpu_custom_call.1} parent=15 // pred_fallthru
          _
        // Predicated region
        $region55: #{tpu_custom_call.1} parent=15 // pred_check
          %p465 = pneg %p80
        $region56: #{tpu_custom_call.1} parent=15 // pred_check_branch
          %467 = sbr.rel (%p465) target = $region58
        $region57: #{tpu_custom_call.1} parent=15 // pred_region
          %s468 = smul.u32 6, %s18
          %s469 = smul.u32 48, %s19
          %p470 = scmp.lt.s32.totalorder %s468, 11
          %s471 = scalar_select %p470, %s468, 11
          %p472 = scmp.lt.s32.totalorder %s469, 47
          %s473 = scalar_select %p472, %s469, 47
          %s474 = smul.addr %s471, 48
          %s475 = sadd.s32 %s473, %s474
          %s476 = smul.addr %s475, 8
          %s477 = scalar_lea.vmem %s1, %s476
          %s478 = smul.u32 6, %s18
          %s479 = smul.u32 48, %s19
        $region58: #{tpu_custom_call.1} parent=15 // pred_fallthru
          _
      $region16: #{tpu_custom_call.1} parent=5 // pred_fallthru
        _
      %p480 = scmp.le.s32.totalorder 1, %s11
      %p481 = scmp.lt.s32.totalorder %s11, 9
      %p482 = pnand %p480, %p481
      %p483 = pneg %p482
      // Predicated region
      $region59: #{tpu_custom_call.1} parent=5 // pred_check
        _
      $region60: #{tpu_custom_call.1} parent=5 // pred_check_branch
        %485 = sbr.rel (%p482) target = $region62
      $region61: #{tpu_custom_call.1} parent=5 // pred_region
        %s486 = ssub.s32 %s11, 1
        %s487 = sand.u32 %s45, 1
        %s488 = sand.u32 %s45, 1
        %s489 = smul.addr %s488, 576
        %s490 = scalar_lea.vmem [#allocation2], %s489
        // Predicated region
        $region63: #{tpu_custom_call.1} parent=61 // pred_check
          %p491 = pneg %p58
        $region64: #{tpu_custom_call.1} parent=61 // pred_check_branch
          %493 = sbr.rel (%p491) target = $region66
        $region65: #{tpu_custom_call.1} parent=61 // pred_region
          _
        $region66: #{tpu_custom_call.1} parent=61 // pred_fallthru
          _
        %s494 = sand.u32 %s45, 1
        %s495 = sand.u32 %s45, 1
        %s496 = smul.addr %s495, 576
        %s497 = scalar_lea.vmem [#allocation2], %s496
        %p498 = pneg %p58
        %p499 = pneg %p55
        %s500 = smul.u32 6, %s21
        %s501 = smul.u32 48, %s22
        %p502 = scmp.lt.s32.totalorder %s500, 11
        %s503 = scalar_select %p502, %s500, 11
        %p504 = scmp.lt.s32.totalorder %s501, 47
        %s505 = scalar_select %p504, %s501, 47
        %s506 = smul.addr %s503, 48
        %s507 = sadd.s32 %s505, %s506
        %s508 = smul.addr %s507, 8
        %s509 = scalar_lea.vmem %s1, %s508
        %p510 = pneg %p86
        %p511 = pneg %p83
        %p512 = pneg %p116
        %p513 = pneg %p113
        %s514 = sand.u32 %s103, 1
        %s515 = scalar_lea.sflag [#allocation4], %s514
        %s516 = sand.u32 %s103, 1
        %s517 = smul.addr %s516, 1728
        %s518 = scalar_lea.vmem [#allocation3], %s517
        %s519 = smul.u32 6, %s21
        %s520 = smul.u32 12, %s23
        %s521 = smul.u32 6, %s21
        %s522 = smul.u32 48, %s22
        %p523 = scmp.lt.s32.totalorder %s521, 11
        %s524 = scalar_select %p523, %s521, 11
        %p525 = scmp.lt.s32.totalorder %s522, 47
        %s526 = scalar_select %p525, %s522, 47
        %s527 = smul.addr %s524, 48
        %s528 = sadd.s32 %s526, %s527
        %s529 = smul.addr %s528, 8
        %s530 = scalar_lea.vmem %s1, %s529
        %s531 = smul.u32 6, %s21
        %s532 = smul.u32 48, %s22
        %s533 = smul.u32 6, %s21
        %s534 = smul.u32 12, %s23
        %s535 = smul.u32 3, %s22
        %v536 = vld [vmem:[%s490] sm:$0xff]
        %v537 = vld [vmem:[%s490 + $0x8] sm:$0xff]
        %v538 = vld [vmem:[%s490 + $0x10] sm:$0xff]
        %v539 = vld [vmem:[%s490 + $0x18] sm:$0xff]
        %v540 = vld [vmem:[%s490 + $0x20] sm:$0xff]
        %v541 = vld [vmem:[%s490 + $0x28] sm:$0xff]
        %v542 = vld [vmem:[%s490 + $0x30] sm:$0xff]
        %v543 = vld [vmem:[%s490 + $0x38] sm:$0xff]
        %v544 = vld [vmem:[%s490 + $0x40] sm:$0xff]
        %v545 = vld [vmem:[%s490 + $0x48] sm:$0xff]
        %v546 = vld [vmem:[%s490 + $0x50] sm:$0xff]
        %v547 = vld [vmem:[%s490 + $0x58] sm:$0xff]
        %v548 = vld [vmem:[%s490 + $0x60] sm:$0xff]
        %v549 = vld [vmem:[%s490 + $0x68] sm:$0xff]
        %v550 = vld [vmem:[%s490 + $0x70] sm:$0xff]
        %v551 = vld [vmem:[%s490 + $0x78] sm:$0xff]
        %v552 = vld [vmem:[%s490 + $0x80] sm:$0xff]
        %v553 = vld [vmem:[%s490 + $0x88] sm:$0xff]
        %v554 = vld [vmem:[%s490 + $0x90] sm:$0xff]
        %v555 = vld [vmem:[%s490 + $0x98] sm:$0xff]
        %v556 = vld [vmem:[%s490 + $0xa0] sm:$0xff]
        %v557 = vld [vmem:[%s490 + $0xa8] sm:$0xff]
        %v558 = vld [vmem:[%s490 + $0xb0] sm:$0xff]
        %v559 = vld [vmem:[%s490 + $0xb8] sm:$0xff]
        %v560 = vld [vmem:[%s490 + $0xc0] sm:$0xff]
        %v561 = vld [vmem:[%s490 + $0xc8] sm:$0xff]
        %v562 = vld [vmem:[%s490 + $0xd0] sm:$0xff]
        %v563 = vld [vmem:[%s490 + $0xd8] sm:$0xff]
        %v564 = vld [vmem:[%s490 + $0xe0] sm:$0xff]
        %v565 = vld [vmem:[%s490 + $0xe8] sm:$0xff]
        %v566 = vld [vmem:[%s490 + $0xf0] sm:$0xff]
        %v567 = vld [vmem:[%s490 + $0xf8] sm:$0xff]
        %v568 = vld [vmem:[%s490 + $0x100] sm:$0xff]
        %v569 = vld [vmem:[%s490 + $0x108] sm:$0xff]
        %v570 = vld [vmem:[%s490 + $0x110] sm:$0xff]
        %v571 = vld [vmem:[%s490 + $0x118] sm:$0xff]
        %v572 = vld [vmem:[%s490 + $0x120] sm:$0xff]
        %v573 = vld [vmem:[%s490 + $0x128] sm:$0xff]
        %v574 = vld [vmem:[%s490 + $0x130] sm:$0xff]
        %v575 = vld [vmem:[%s490 + $0x138] sm:$0xff]
        %v576 = vld [vmem:[%s490 + $0x140] sm:$0xff]
        %v577 = vld [vmem:[%s490 + $0x148] sm:$0xff]
        %v578 = vld [vmem:[%s490 + $0x150] sm:$0xff]
        %v579 = vld [vmem:[%s490 + $0x158] sm:$0xff]
        %v580 = vld [vmem:[%s490 + $0x160] sm:$0xff]
        %v581 = vld [vmem:[%s490 + $0x168] sm:$0xff]
        %v582 = vld [vmem:[%s490 + $0x170] sm:$0xff]
        %v583 = vld [vmem:[%s490 + $0x178] sm:$0xff]
        %v584 = vld [vmem:[%s490 + $0x180] sm:$0xff]
        %v585 = vld [vmem:[%s490 + $0x188] sm:$0xff]
        %v586 = vld [vmem:[%s490 + $0x190] sm:$0xff]
        %v587 = vld [vmem:[%s490 + $0x198] sm:$0xff]
        %v588 = vld [vmem:[%s490 + $0x1a0] sm:$0xff]
        %v589 = vld [vmem:[%s490 + $0x1a8] sm:$0xff]
        %v590 = vld [vmem:[%s490 + $0x1b0] sm:$0xff]
        %v591 = vld [vmem:[%s490 + $0x1b8] sm:$0xff]
        %v592 = vld [vmem:[%s490 + $0x1c0] sm:$0xff]
        %v593 = vld [vmem:[%s490 + $0x1c8] sm:$0xff]
        %v594 = vld [vmem:[%s490 + $0x1d0] sm:$0xff]
        %v595 = vld [vmem:[%s490 + $0x1d8] sm:$0xff]
        %v596 = vld [vmem:[%s490 + $0x1e0] sm:$0xff]
        %v597 = vld [vmem:[%s490 + $0x1e8] sm:$0xff]
        %v598 = vld [vmem:[%s490 + $0x1f0] sm:$0xff]
        %v599 = vld [vmem:[%s490 + $0x1f8] sm:$0xff]
        %v600 = vld [vmem:[%s490 + $0x200] sm:$0xff]
        %v601 = vld [vmem:[%s490 + $0x208] sm:$0xff]
        %v602 = vld [vmem:[%s490 + $0x210] sm:$0xff]
        %v603 = vld [vmem:[%s490 + $0x218] sm:$0xff]
        %v604 = vld [vmem:[%s490 + $0x220] sm:$0xff]
        %v605 = vld [vmem:[%s490 + $0x228] sm:$0xff]
        %v606 = vld [vmem:[%s490 + $0x230] sm:$0xff]
        %v607 = vld [vmem:[%s490 + $0x238] sm:$0xff]
        %v608 = vld [vmem:[%s530] sm:$0xff]
        %v609 = vld [vmem:[%s530 + $0x8] sm:$0xff]
        %v610 = vld [vmem:[%s530 + $0x10] sm:$0xff]
        %v611 = vld [vmem:[%s530 + $0x18] sm:$0xff]
        %v612 = vld [vmem:[%s530 + $0x20] sm:$0xff]
        %v613 = vld [vmem:[%s530 + $0x28] sm:$0xff]
        %v614 = vld [vmem:[%s530 + $0x30] sm:$0xff]
        %v615 = vld [vmem:[%s530 + $0x38] sm:$0xff]
        %v616 = vld [vmem:[%s530 + $0x40] sm:$0xff]
        %v617 = vld [vmem:[%s530 + $0x48] sm:$0xff]
        %v618 = vld [vmem:[%s530 + $0x50] sm:$0xff]
        %v619 = vld [vmem:[%s530 + $0x58] sm:$0xff]
        %v620 = vld [vmem:[%s530 + $0x60] sm:$0xff]
        %v621 = vld [vmem:[%s530 + $0x68] sm:$0xff]
        %v622 = vld [vmem:[%s530 + $0x70] sm:$0xff]
        %v623 = vld [vmem:[%s530 + $0x78] sm:$0xff]
        %v624 = vld [vmem:[%s530 + $0x80] sm:$0xff]
        %v625 = vld [vmem:[%s530 + $0x88] sm:$0xff]
        %v626 = vld [vmem:[%s530 + $0x90] sm:$0xff]
        %v627 = vld [vmem:[%s530 + $0x98] sm:$0xff]
        %v628 = vld [vmem:[%s530 + $0xa0] sm:$0xff]
        %v629 = vld [vmem:[%s530 + $0xa8] sm:$0xff]
        %v630 = vld [vmem:[%s530 + $0xb0] sm:$0xff]
        %v631 = vld [vmem:[%s530 + $0xb8] sm:$0xff]
        %v632 = vld [vmem:[%s530 + $0xc0] sm:$0xff]
        %v633 = vld [vmem:[%s530 + $0xc8] sm:$0xff]
        %v634 = vld [vmem:[%s530 + $0xd0] sm:$0xff]
        %v635 = vld [vmem:[%s530 + $0xd8] sm:$0xff]
        %v636 = vld [vmem:[%s530 + $0xe0] sm:$0xff]
        %v637 = vld [vmem:[%s530 + $0xe8] sm:$0xff]
        %v638 = vld [vmem:[%s530 + $0xf0] sm:$0xff]
        %v639 = vld [vmem:[%s530 + $0xf8] sm:$0xff]
        %v640 = vld [vmem:[%s530 + $0x100] sm:$0xff]
        %v641 = vld [vmem:[%s530 + $0x108] sm:$0xff]
        %v642 = vld [vmem:[%s530 + $0x110] sm:$0xff]
        %v643 = vld [vmem:[%s530 + $0x118] sm:$0xff]
        %v644 = vld [vmem:[%s530 + $0x120] sm:$0xff]
        %v645 = vld [vmem:[%s530 + $0x128] sm:$0xff]
        %v646 = vld [vmem:[%s530 + $0x130] sm:$0xff]
        %v647 = vld [vmem:[%s530 + $0x138] sm:$0xff]
        %v648 = vld [vmem:[%s530 + $0x140] sm:$0xff]
        %v649 = vld [vmem:[%s530 + $0x148] sm:$0xff]
        %v650 = vld [vmem:[%s530 + $0x150] sm:$0xff]
        %v651 = vld [vmem:[%s530 + $0x158] sm:$0xff]
        %v652 = vld [vmem:[%s530 + $0x160] sm:$0xff]
        %v653 = vld [vmem:[%s530 + $0x168] sm:$0xff]
        %v654 = vld [vmem:[%s530 + $0x170] sm:$0xff]
        %v655 = vld [vmem:[%s530 + $0x178] sm:$0xff]
        %v656 = vld [vmem:[%s530 + $0x180] sm:$0xff]
        %v657 = vld [vmem:[%s530 + $0x188] sm:$0xff]
        %v658 = vld [vmem:[%s530 + $0x190] sm:$0xff]
        %v659 = vld [vmem:[%s530 + $0x198] sm:$0xff]
        %v660 = vld [vmem:[%s530 + $0x1a0] sm:$0xff]
        %v661 = vld [vmem:[%s530 + $0x1a8] sm:$0xff]
        %v662 = vld [vmem:[%s530 + $0x1b0] sm:$0xff]
        %v663 = vld [vmem:[%s530 + $0x1b8] sm:$0xff]
        %v664 = vld [vmem:[%s530 + $0x1c0] sm:$0xff]
        %v665 = vld [vmem:[%s530 + $0x1c8] sm:$0xff]
        %v666 = vld [vmem:[%s530 + $0x1d0] sm:$0xff]
        %v667 = vld [vmem:[%s530 + $0x1d8] sm:$0xff]
        %v668 = vld [vmem:[%s530 + $0x1e0] sm:$0xff]
        %v669 = vld [vmem:[%s530 + $0x1e8] sm:$0xff]
        %v670 = vld [vmem:[%s530 + $0x1f0] sm:$0xff]
        %v671 = vld [vmem:[%s530 + $0x1f8] sm:$0xff]
        %v672 = vld [vmem:[%s530 + $0x200] sm:$0xff]
        %v673 = vld [vmem:[%s530 + $0x208] sm:$0xff]
        %v674 = vld [vmem:[%s530 + $0x210] sm:$0xff]
        %v675 = vld [vmem:[%s530 + $0x218] sm:$0xff]
        %v676 = vld [vmem:[%s530 + $0x220] sm:$0xff]
        %v677 = vld [vmem:[%s530 + $0x228] sm:$0xff]
        %v678 = vld [vmem:[%s530 + $0x230] sm:$0xff]
        %v679 = vld [vmem:[%s530 + $0x238] sm:$0xff]
        %v680 = vld [vmem:[%s530 + $0x240] sm:$0xff]
        %v681 = vld [vmem:[%s530 + $0x248] sm:$0xff]
        %v682 = vld [vmem:[%s530 + $0x250] sm:$0xff]
        %v683 = vld [vmem:[%s530 + $0x258] sm:$0xff]
        %v684 = vld [vmem:[%s530 + $0x260] sm:$0xff]
        %v685 = vld [vmem:[%s530 + $0x268] sm:$0xff]
        %v686 = vld [vmem:[%s530 + $0x270] sm:$0xff]
        %v687 = vld [vmem:[%s530 + $0x278] sm:$0xff]
        %v688 = vld [vmem:[%s530 + $0x280] sm:$0xff]
        %v689 = vld [vmem:[%s530 + $0x288] sm:$0xff]
        %v690 = vld [vmem:[%s530 + $0x290] sm:$0xff]
        %v691 = vld [vmem:[%s530 + $0x298] sm:$0xff]
        %v692 = vld [vmem:[%s530 + $0x2a0] sm:$0xff]
        %v693 = vld [vmem:[%s530 + $0x2a8] sm:$0xff]
        %v694 = vld [vmem:[%s530 + $0x2b0] sm:$0xff]
        %v695 = vld [vmem:[%s530 + $0x2b8] sm:$0xff]
        %v696 = vld [vmem:[%s530 + $0x2c0] sm:$0xff]
        %v697 = vld [vmem:[%s530 + $0x2c8] sm:$0xff]
        %v698 = vld [vmem:[%s530 + $0x2d0] sm:$0xff]
        %v699 = vld [vmem:[%s530 + $0x2d8] sm:$0xff]
        %v700 = vld [vmem:[%s530 + $0x2e0] sm:$0xff]
        %v701 = vld [vmem:[%s530 + $0x2e8] sm:$0xff]
        %v702 = vld [vmem:[%s530 + $0x2f0] sm:$0xff]
        %v703 = vld [vmem:[%s530 + $0x2f8] sm:$0xff]
        %v704 = vld [vmem:[%s530 + $0x300] sm:$0xff]
        %v705 = vld [vmem:[%s530 + $0x308] sm:$0xff]
        %v706 = vld [vmem:[%s530 + $0x310] sm:$0xff]
        %v707 = vld [vmem:[%s530 + $0x318] sm:$0xff]
        %v708 = vld [vmem:[%s530 + $0x320] sm:$0xff]
        %v709 = vld [vmem:[%s530 + $0x328] sm:$0xff]
        %v710 = vld [vmem:[%s530 + $0x330] sm:$0xff]
        %v711 = vld [vmem:[%s530 + $0x338] sm:$0xff]
        %v712 = vld [vmem:[%s530 + $0x340] sm:$0xff]
        %v713 = vld [vmem:[%s530 + $0x348] sm:$0xff]
        %v714 = vld [vmem:[%s530 + $0x350] sm:$0xff]
        %v715 = vld [vmem:[%s530 + $0x358] sm:$0xff]
        %v716 = vld [vmem:[%s530 + $0x360] sm:$0xff]
        %v717 = vld [vmem:[%s530 + $0x368] sm:$0xff]
        %v718 = vld [vmem:[%s530 + $0x370] sm:$0xff]
        %v719 = vld [vmem:[%s530 + $0x378] sm:$0xff]
        %v720 = vld [vmem:[%s530 + $0x380] sm:$0xff]
        %v721 = vld [vmem:[%s530 + $0x388] sm:$0xff]
        %v722 = vld [vmem:[%s530 + $0x390] sm:$0xff]
        %v723 = vld [vmem:[%s530 + $0x398] sm:$0xff]
        %v724 = vld [vmem:[%s530 + $0x3a0] sm:$0xff]
        %v725 = vld [vmem:[%s530 + $0x3a8] sm:$0xff]
        %v726 = vld [vmem:[%s530 + $0x3b0] sm:$0xff]
        %v727 = vld [vmem:[%s530 + $0x3b8] sm:$0xff]
        %v728 = vld [vmem:[%s530 + $0x3c0] sm:$0xff]
        %v729 = vld [vmem:[%s530 + $0x3c8] sm:$0xff]
        %v730 = vld [vmem:[%s530 + $0x3d0] sm:$0xff]
        %v731 = vld [vmem:[%s530 + $0x3d8] sm:$0xff]
        %v732 = vld [vmem:[%s530 + $0x3e0] sm:$0xff]
        %v733 = vld [vmem:[%s530 + $0x3e8] sm:$0xff]
        %v734 = vld [vmem:[%s530 + $0x3f0] sm:$0xff]
        %v735 = vld [vmem:[%s530 + $0x3f8] sm:$0xff]
        %v736 = vld [vmem:[%s530 + $0x400] sm:$0xff]
        %v737 = vld [vmem:[%s530 + $0x408] sm:$0xff]
        %v738 = vld [vmem:[%s530 + $0x410] sm:$0xff]
        %v739 = vld [vmem:[%s530 + $0x418] sm:$0xff]
        %v740 = vld [vmem:[%s530 + $0x420] sm:$0xff]
        %v741 = vld [vmem:[%s530 + $0x428] sm:$0xff]
        %v742 = vld [vmem:[%s530 + $0x430] sm:$0xff]
        %v743 = vld [vmem:[%s530 + $0x438] sm:$0xff]
        %v744 = vld [vmem:[%s530 + $0x440] sm:$0xff]
        %v745 = vld [vmem:[%s530 + $0x448] sm:$0xff]
        %v746 = vld [vmem:[%s530 + $0x450] sm:$0xff]
        %v747 = vld [vmem:[%s530 + $0x458] sm:$0xff]
        %v748 = vld [vmem:[%s530 + $0x460] sm:$0xff]
        %v749 = vld [vmem:[%s530 + $0x468] sm:$0xff]
        %v750 = vld [vmem:[%s530 + $0x470] sm:$0xff]
        %v751 = vld [vmem:[%s530 + $0x478] sm:$0xff]
        %v752 = vld [vmem:[%s530 + $0x480] sm:$0xff]
        %v753 = vld [vmem:[%s530 + $0x488] sm:$0xff]
        %v754 = vld [vmem:[%s530 + $0x490] sm:$0xff]
        %v755 = vld [vmem:[%s530 + $0x498] sm:$0xff]
        %v756 = vld [vmem:[%s530 + $0x4a0] sm:$0xff]
        %v757 = vld [vmem:[%s530 + $0x4a8] sm:$0xff]
        %v758 = vld [vmem:[%s530 + $0x4b0] sm:$0xff]
        %v759 = vld [vmem:[%s530 + $0x4b8] sm:$0xff]
        %v760 = vld [vmem:[%s530 + $0x4c0] sm:$0xff]
        %v761 = vld [vmem:[%s530 + $0x4c8] sm:$0xff]
        %v762 = vld [vmem:[%s530 + $0x4d0] sm:$0xff]
        %v763 = vld [vmem:[%s530 + $0x4d8] sm:$0xff]
        %v764 = vld [vmem:[%s530 + $0x4e0] sm:$0xff]
        %v765 = vld [vmem:[%s530 + $0x4e8] sm:$0xff]
        %v766 = vld [vmem:[%s530 + $0x4f0] sm:$0xff]
        %v767 = vld [vmem:[%s530 + $0x4f8] sm:$0xff]
        %v768 = vld [vmem:[%s530 + $0x500] sm:$0xff]
        %v769 = vld [vmem:[%s530 + $0x508] sm:$0xff]
        %v770 = vld [vmem:[%s530 + $0x510] sm:$0xff]
        %v771 = vld [vmem:[%s530 + $0x518] sm:$0xff]
        %v772 = vld [vmem:[%s530 + $0x520] sm:$0xff]
        %v773 = vld [vmem:[%s530 + $0x528] sm:$0xff]
        %v774 = vld [vmem:[%s530 + $0x530] sm:$0xff]
        %v775 = vld [vmem:[%s530 + $0x538] sm:$0xff]
        %v776 = vld [vmem:[%s530 + $0x540] sm:$0xff]
        %v777 = vld [vmem:[%s530 + $0x548] sm:$0xff]
        %v778 = vld [vmem:[%s530 + $0x550] sm:$0xff]
        %v779 = vld [vmem:[%s530 + $0x558] sm:$0xff]
        %v780 = vld [vmem:[%s530 + $0x560] sm:$0xff]
        %v781 = vld [vmem:[%s530 + $0x568] sm:$0xff]
        %v782 = vld [vmem:[%s530 + $0x570] sm:$0xff]
        %v783 = vld [vmem:[%s530 + $0x578] sm:$0xff]
        %v784 = vld [vmem:[%s530 + $0x580] sm:$0xff]
        %v785 = vld [vmem:[%s530 + $0x588] sm:$0xff]
        %v786 = vld [vmem:[%s530 + $0x590] sm:$0xff]
        %v787 = vld [vmem:[%s530 + $0x598] sm:$0xff]
        %v788 = vld [vmem:[%s530 + $0x5a0] sm:$0xff]
        %v789 = vld [vmem:[%s530 + $0x5a8] sm:$0xff]
        %v790 = vld [vmem:[%s530 + $0x5b0] sm:$0xff]
        %v791 = vld [vmem:[%s530 + $0x5b8] sm:$0xff]
        %v792 = vld [vmem:[%s530 + $0x5c0] sm:$0xff]
        %v793 = vld [vmem:[%s530 + $0x5c8] sm:$0xff]
        %v794 = vld [vmem:[%s530 + $0x5d0] sm:$0xff]
        %v795 = vld [vmem:[%s530 + $0x5d8] sm:$0xff]
        %v796 = vld [vmem:[%s530 + $0x5e0] sm:$0xff]
        %v797 = vld [vmem:[%s530 + $0x5e8] sm:$0xff]
        %v798 = vld [vmem:[%s530 + $0x5f0] sm:$0xff]
        %v799 = vld [vmem:[%s530 + $0x5f8] sm:$0xff]
        %v800 = vld [vmem:[%s530 + $0x600] sm:$0xff]
        %v801 = vld [vmem:[%s530 + $0x608] sm:$0xff]
        %v802 = vld [vmem:[%s530 + $0x610] sm:$0xff]
        %v803 = vld [vmem:[%s530 + $0x618] sm:$0xff]
        %v804 = vld [vmem:[%s530 + $0x620] sm:$0xff]
        %v805 = vld [vmem:[%s530 + $0x628] sm:$0xff]
        %v806 = vld [vmem:[%s530 + $0x630] sm:$0xff]
        %v807 = vld [vmem:[%s530 + $0x638] sm:$0xff]
        %v808 = vld [vmem:[%s530 + $0x640] sm:$0xff]
        %v809 = vld [vmem:[%s530 + $0x648] sm:$0xff]
        %v810 = vld [vmem:[%s530 + $0x650] sm:$0xff]
        %v811 = vld [vmem:[%s530 + $0x658] sm:$0xff]
        %v812 = vld [vmem:[%s530 + $0x660] sm:$0xff]
        %v813 = vld [vmem:[%s530 + $0x668] sm:$0xff]
        %v814 = vld [vmem:[%s530 + $0x670] sm:$0xff]
        %v815 = vld [vmem:[%s530 + $0x678] sm:$0xff]
        %v816 = vld [vmem:[%s530 + $0x680] sm:$0xff]
        %v817 = vld [vmem:[%s530 + $0x688] sm:$0xff]
        %v818 = vld [vmem:[%s530 + $0x690] sm:$0xff]
        %v819 = vld [vmem:[%s530 + $0x698] sm:$0xff]
        %v820 = vld [vmem:[%s530 + $0x6a0] sm:$0xff]
        %v821 = vld [vmem:[%s530 + $0x6a8] sm:$0xff]
        %v822 = vld [vmem:[%s530 + $0x6b0] sm:$0xff]
        %v823 = vld [vmem:[%s530 + $0x6b8] sm:$0xff]
        %v824 = vld [vmem:[%s530 + $0x6c0] sm:$0xff]
        %v825 = vld [vmem:[%s530 + $0x6c8] sm:$0xff]
        %v826 = vld [vmem:[%s530 + $0x6d0] sm:$0xff]
        %v827 = vld [vmem:[%s530 + $0x6d8] sm:$0xff]
        %v828 = vld [vmem:[%s530 + $0x6e0] sm:$0xff]
        %v829 = vld [vmem:[%s530 + $0x6e8] sm:$0xff]
        %v830 = vld [vmem:[%s530 + $0x6f0] sm:$0xff]
        %v831 = vld [vmem:[%s530 + $0x6f8] sm:$0xff]
        %v832 = vld [vmem:[%s530 + $0x700] sm:$0xff]
        %v833 = vld [vmem:[%s530 + $0x708] sm:$0xff]
        %v834 = vld [vmem:[%s530 + $0x710] sm:$0xff]
        %v835 = vld [vmem:[%s530 + $0x718] sm:$0xff]
        %v836 = vld [vmem:[%s530 + $0x720] sm:$0xff]
        %v837 = vld [vmem:[%s530 + $0x728] sm:$0xff]
        %v838 = vld [vmem:[%s530 + $0x730] sm:$0xff]
        %v839 = vld [vmem:[%s530 + $0x738] sm:$0xff]
        %v840 = vld [vmem:[%s530 + $0x740] sm:$0xff]
        %v841 = vld [vmem:[%s530 + $0x748] sm:$0xff]
        %v842 = vld [vmem:[%s530 + $0x750] sm:$0xff]
        %v843 = vld [vmem:[%s530 + $0x758] sm:$0xff]
        %v844 = vld [vmem:[%s530 + $0x760] sm:$0xff]
        %v845 = vld [vmem:[%s530 + $0x768] sm:$0xff]
        %v846 = vld [vmem:[%s530 + $0x770] sm:$0xff]
        %v847 = vld [vmem:[%s530 + $0x778] sm:$0xff]
        %v848 = vld [vmem:[%s530 + $0x780] sm:$0xff]
        %v849 = vld [vmem:[%s530 + $0x788] sm:$0xff]
        %v850 = vld [vmem:[%s530 + $0x790] sm:$0xff]
        %v851 = vld [vmem:[%s530 + $0x798] sm:$0xff]
        %v852 = vld [vmem:[%s530 + $0x7a0] sm:$0xff]
        %v853 = vld [vmem:[%s530 + $0x7a8] sm:$0xff]
        %v854 = vld [vmem:[%s530 + $0x7b0] sm:$0xff]
        %v855 = vld [vmem:[%s530 + $0x7b8] sm:$0xff]
        %v856 = vld [vmem:[%s530 + $0x7c0] sm:$0xff]
        %v857 = vld [vmem:[%s530 + $0x7c8] sm:$0xff]
        %v858 = vld [vmem:[%s530 + $0x7d0] sm:$0xff]
        %v859 = vld [vmem:[%s530 + $0x7d8] sm:$0xff]
        %v860 = vld [vmem:[%s530 + $0x7e0] sm:$0xff]
        %v861 = vld [vmem:[%s530 + $0x7e8] sm:$0xff]
        %v862 = vld [vmem:[%s530 + $0x7f0] sm:$0xff]
        %v863 = vld [vmem:[%s530 + $0x7f8] sm:$0xff]
        %v864 = vld [vmem:[%s530 + $0x800] sm:$0xff]
        %v865 = vld [vmem:[%s530 + $0x808] sm:$0xff]
        %v866 = vld [vmem:[%s530 + $0x810] sm:$0xff]
        %v867 = vld [vmem:[%s530 + $0x818] sm:$0xff]
        %v868 = vld [vmem:[%s530 + $0x820] sm:$0xff]
        %v869 = vld [vmem:[%s530 + $0x828] sm:$0xff]
        %v870 = vld [vmem:[%s530 + $0x830] sm:$0xff]
        %v871 = vld [vmem:[%s530 + $0x838] sm:$0xff]
        %v872 = vld [vmem:[%s530 + $0x840] sm:$0xff]
        %v873 = vld [vmem:[%s530 + $0x848] sm:$0xff]
        %v874 = vld [vmem:[%s530 + $0x850] sm:$0xff]
        %v875 = vld [vmem:[%s530 + $0x858] sm:$0xff]
        %v876 = vld [vmem:[%s530 + $0x860] sm:$0xff]
        %v877 = vld [vmem:[%s530 + $0x868] sm:$0xff]
        %v878 = vld [vmem:[%s530 + $0x870] sm:$0xff]
        %v879 = vld [vmem:[%s530 + $0x878] sm:$0xff]
        %v880 = vld [vmem:[%s530 + $0x880] sm:$0xff]
        %v881 = vld [vmem:[%s530 + $0x888] sm:$0xff]
        %v882 = vld [vmem:[%s530 + $0x890] sm:$0xff]
        %v883 = vld [vmem:[%s530 + $0x898] sm:$0xff]
        %v884 = vld [vmem:[%s530 + $0x8a0] sm:$0xff]
        %v885 = vld [vmem:[%s530 + $0x8a8] sm:$0xff]
        %v886 = vld [vmem:[%s530 + $0x8b0] sm:$0xff]
        %v887 = vld [vmem:[%s530 + $0x8b8] sm:$0xff]
        %v888 = vld [vmem:[%s530 + $0x8c0] sm:$0xff]
        %v889 = vld [vmem:[%s530 + $0x8c8] sm:$0xff]
        %v890 = vld [vmem:[%s530 + $0x8d0] sm:$0xff]
        %v891 = vld [vmem:[%s530 + $0x8d8] sm:$0xff]
        %v892 = vld [vmem:[%s530 + $0x8e0] sm:$0xff]
        %v893 = vld [vmem:[%s530 + $0x8e8] sm:$0xff]
        %v894 = vld [vmem:[%s530 + $0x8f0] sm:$0xff]
        %v895 = vld [vmem:[%s530 + $0x8f8] sm:$0xff]
        %vm896 = vcmask 523264
        %v898 = vsel %vm896, %v536, 0
        %v901 = vsel %vm896, %v537, 0
        %v904 = vsel %vm896, %v538, 0
        %v907 = vsel %vm896, %v539, 0
        %v910 = vsel %vm896, %v540, 0
        %v913 = vsel %vm896, %v541, 0
        %v916 = vsel %vm896, %v542, 0
        %v919 = vsel %vm896, %v543, 0
        %v922 = vsel %vm896, %v544, 0
        %v925 = vsel %vm896, %v545, 0
        %v928 = vsel %vm896, %v546, 0
        %v931 = vsel %vm896, %v547, 0
        %v934 = vsel %vm896, %v608, 0
        %v937 = vsel %vm896, %v609, 0
        %v940 = vsel %vm896, %v610, 0
        %v943 = vsel %vm896, %v611, 0
        %v946 = vsel %vm896, %v612, 0
        %v949 = vsel %vm896, %v613, 0
        %v952 = vsel %vm896, %v614, 0
        %v955 = vsel %vm896, %v615, 0
        %v958 = vsel %vm896, %v616, 0
        %v961 = vsel %vm896, %v617, 0
        %v964 = vsel %vm896, %v618, 0
        %v967 = vsel %vm896, %v619, 0
        %v970 = vsel %vm896, %v620, 0
        %v973 = vsel %vm896, %v621, 0
        %v976 = vsel %vm896, %v622, 0
        %v979 = vsel %vm896, %v623, 0
        %v982 = vsel %vm896, %v624, 0
        %v985 = vsel %vm896, %v625, 0
        %v988 = vsel %vm896, %v626, 0
        %v991 = vsel %vm896, %v627, 0
        %v994 = vsel %vm896, %v628, 0
        %v997 = vsel %vm896, %v629, 0
        %v1000 = vsel %vm896, %v630, 0
        %v1003 = vsel %vm896, %v631, 0
        %v1006 = vsel %vm896, %v632, 0
        %v1009 = vsel %vm896, %v633, 0
        %v1012 = vsel %vm896, %v634, 0
        %v1015 = vsel %vm896, %v635, 0
        %v1018 = vsel %vm896, %v636, 0
        %v1021 = vsel %vm896, %v637, 0
        %v1024 = vsel %vm896, %v638, 0
        %v1027 = vsel %vm896, %v639, 0
        %v1030 = vsel %vm896, %v640, 0
        %v1033 = vsel %vm896, %v641, 0
        %v1036 = vsel %vm896, %v642, 0
        %v1039 = vsel %vm896, %v643, 0
        %v1042 = vsel %vm896, %v644, 0
        %v1045 = vsel %vm896, %v645, 0
        %v1048 = vsel %vm896, %v646, 0
        %v1051 = vsel %vm896, %v647, 0
        %v1054 = vsel %vm896, %v648, 0
        %v1057 = vsel %vm896, %v649, 0
        %v1060 = vsel %vm896, %v650, 0
        %v1063 = vsel %vm896, %v651, 0
        %v1066 = vsel %vm896, %v652, 0
        %v1069 = vsel %vm896, %v653, 0
        %v1072 = vsel %vm896, %v654, 0
        %v1075 = vsel %vm896, %v655, 0
        %1077 = vmatpush.xpose.msra.mxu0 %v979
        %1078 = vmatpush.xpose.msra.mxu0 %v976
        %1079 = vmatpush.xpose.msra.mxu0 %v973
        %1080 = vmatpush.xpose.msra.mxu0 %v970
        %1081 = vmatpush.xpose.msra.mxu0 %v967
        %1082 = vmatpush.xpose.msra.mxu0 %v964
        %1083 = vmatpush.xpose.msra.mxu0 %v961
        %1084 = vmatpush.xpose.msra.mxu0 %v958
        %1085 = vmatpush.xpose.msra.mxu0 %v955
        %1086 = vmatpush.xpose.msra.mxu0 %v952
        %1087 = vmatpush.xpose.msra.mxu0 %v949
        %1088 = vmatpush.xpose.msra.mxu0 %v946
        %1089 = vmatpush.xpose.msra.mxu0 %v943
        %1090 = vmatpush.xpose.msra.mxu0 %v940
        %1091 = vmatpush.xpose.msra.mxu0 %v937
        %1092 = vmatpush.xpose.msra.mxu0 %v934
        %1093 = vmatmul.f32.gmra.mxu0 %v898
        %v1094 = vpop.f32.mrf.mxu0
        %v1095 = vadd.f32 0.0, %v1094
        %1096 = vmatmul.f32.gmra.mxu0 %v901
        %v1097 = vpop.f32.mrf.mxu0
        %v1098 = vadd.f32 0.0, %v1097
        %1099 = vmatmul.f32.gmra.mxu0 %v904
        %v1100 = vpop.f32.mrf.mxu0
        %v1101 = vadd.f32 0.0, %v1100
        %1102 = vmatmul.f32.gmra.mxu0 %v907
        %v1103 = vpop.f32.mrf.mxu0
        %v1104 = vadd.f32 0.0, %v1103
        %1105 = vmatmul.f32.gmra.mxu0 %v910
        %v1106 = vpop.f32.mrf.mxu0
        %v1107 = vadd.f32 0.0, %v1106
        %1108 = vmatmul.f32.gmra.mxu0 %v913
        %v1109 = vpop.f32.mrf.mxu0
        %v1110 = vadd.f32 0.0, %v1109
        %1111 = vmatmul.f32.gmra.mxu0 %v916
        %v1112 = vpop.f32.mrf.mxu0
        %v1113 = vadd.f32 0.0, %v1112
        %1114 = vmatmul.f32.gmra.mxu0 %v919
        %v1115 = vpop.f32.mrf.mxu0
        %v1116 = vadd.f32 0.0, %v1115
        %1117 = vmatmul.f32.gmra.mxu0 %v922
        %v1118 = vpop.f32.mrf.mxu0
        %v1119 = vadd.f32 0.0, %v1118
        %1120 = vmatmul.f32.gmra.mxu0 %v925
        %v1121 = vpop.f32.mrf.mxu0
        %v1122 = vadd.f32 0.0, %v1121
        %1123 = vmatmul.f32.gmra.mxu0 %v928
        %v1124 = vpop.f32.mrf.mxu0
        %v1125 = vadd.f32 0.0, %v1124
        %1126 = vmatmul.f32.gmra.mxu0 %v931
        %v1127 = vpop.f32.mrf.mxu0
        %v1128 = vadd.f32 0.0, %v1127
        %1129 = vdwg.mxu0
        %1130 = vmatpush.xpose.msra.mxu0 %v1027
        %1131 = vmatpush.xpose.msra.mxu0 %v1024
        %1132 = vmatpush.xpose.msra.mxu0 %v1021
        %1133 = vmatpush.xpose.msra.mxu0 %v1018
        %1134 = vmatpush.xpose.msra.mxu0 %v1015
        %1135 = vmatpush.xpose.msra.mxu0 %v1012
        %1136 = vmatpush.xpose.msra.mxu0 %v1009
        %1137 = vmatpush.xpose.msra.mxu0 %v1006
        %1138 = vmatpush.xpose.msra.mxu0 %v1003
        %1139 = vmatpush.xpose.msra.mxu0 %v1000
        %1140 = vmatpush.xpose.msra.mxu0 %v997
        %1141 = vmatpush.xpose.msra.mxu0 %v994
        %1142 = vmatpush.xpose.msra.mxu0 %v991
        %1143 = vmatpush.xpose.msra.mxu0 %v988
        %1144 = vmatpush.xpose.msra.mxu0 %v985
        %1145 = vmatpush.xpose.msra.mxu0 %v982
        %1146 = vmatmul.f32.gmra.mxu0 %v898
        %v1147 = vpop.f32.mrf.mxu0
        %v1148 = vadd.f32 0.0, %v1147
        %1149 = vmatmul.f32.gmra.mxu0 %v901
        %v1150 = vpop.f32.mrf.mxu0
        %v1151 = vadd.f32 0.0, %v1150
        %1152 = vmatmul.f32.gmra.mxu0 %v904
        %v1153 = vpop.f32.mrf.mxu0
        %v1154 = vadd.f32 0.0, %v1153
        %1155 = vmatmul.f32.gmra.mxu0 %v907
        %v1156 = vpop.f32.mrf.mxu0
        %v1157 = vadd.f32 0.0, %v1156
        %1158 = vmatmul.f32.gmra.mxu0 %v910
        %v1159 = vpop.f32.mrf.mxu0
        %v1160 = vadd.f32 0.0, %v1159
        %1161 = vmatmul.f32.gmra.mxu0 %v913
        %v1162 = vpop.f32.mrf.mxu0
        %v1163 = vadd.f32 0.0, %v1162
        %1164 = vmatmul.f32.gmra.mxu0 %v916
        %v1165 = vpop.f32.mrf.mxu0
        %v1166 = vadd.f32 0.0, %v1165
        %1167 = vmatmul.f32.gmra.mxu0 %v919
        %v1168 = vpop.f32.mrf.mxu0
        %v1169 = vadd.f32 0.0, %v1168
        %1170 = vmatmul.f32.gmra.mxu0 %v922
        %v1171 = vpop.f32.mrf.mxu0
        %v1172 = vadd.f32 0.0, %v1171
        %1173 = vmatmul.f32.gmra.mxu0 %v925
        %v1174 = vpop.f32.mrf.mxu0
        %v1175 = vadd.f32 0.0, %v1174
        %1176 = vmatmul.f32.gmra.mxu0 %v928
        %v1177 = vpop.f32.mrf.mxu0
        %v1178 = vadd.f32 0.0, %v1177
        %1179 = vmatmul.f32.gmra.mxu0 %v931
        %v1180 = vpop.f32.mrf.mxu0
        %v1181 = vadd.f32 0.0, %v1180
        %1182 = vdwg.mxu0
        %1183 = vmatpush.xpose.msra.mxu0 %v1075
        %1184 = vmatpush.xpose.msra.mxu0 %v1072
        %1185 = vmatpush.xpose.msra.mxu0 %v1069
        %1186 = vmatpush.xpose.msra.mxu0 %v1066
        %1187 = vmatpush.xpose.msra.mxu0 %v1063
        %1188 = vmatpush.xpose.msra.mxu0 %v1060
        %1189 = vmatpush.xpose.msra.mxu0 %v1057
        %1190 = vmatpush.xpose.msra.mxu0 %v1054
        %1191 = vmatpush.xpose.msra.mxu0 %v1051
        %1192 = vmatpush.xpose.msra.mxu0 %v1048
        %1193 = vmatpush.xpose.msra.mxu0 %v1045
        %1194 = vmatpush.xpose.msra.mxu0 %v1042
        %1195 = vmatpush.xpose.msra.mxu0 %v1039
        %1196 = vmatpush.xpose.msra.mxu0 %v1036
        %1197 = vmatpush.xpose.msra.mxu0 %v1033
        %1198 = vmatpush.xpose.msra.mxu0 %v1030
        %1199 = vmatmul.f32.gmra.mxu0 %v898
        %v1200 = vpop.f32.mrf.mxu0
        %v1201 = vadd.f32 0.0, %v1200
        %1202 = vmatmul.f32.gmra.mxu0 %v901
        %v1203 = vpop.f32.mrf.mxu0
        %v1204 = vadd.f32 0.0, %v1203
        %1205 = vmatmul.f32.gmra.mxu0 %v904
        %v1206 = vpop.f32.mrf.mxu0
        %v1207 = vadd.f32 0.0, %v1206
        %1208 = vmatmul.f32.gmra.mxu0 %v907
        %v1209 = vpop.f32.mrf.mxu0
        %v1210 = vadd.f32 0.0, %v1209
        %1211 = vmatmul.f32.gmra.mxu0 %v910
        %v1212 = vpop.f32.mrf.mxu0
        %v1213 = vadd.f32 0.0, %v1212
        %1214 = vmatmul.f32.gmra.mxu0 %v913
        %v1215 = vpop.f32.mrf.mxu0
        %v1216 = vadd.f32 0.0, %v1215
        %1217 = vmatmul.f32.gmra.mxu0 %v916
        %v1218 = vpop.f32.mrf.mxu0
        %v1219 = vadd.f32 0.0, %v1218
        %1220 = vmatmul.f32.gmra.mxu0 %v919
        %v1221 = vpop.f32.mrf.mxu0
        %v1222 = vadd.f32 0.0, %v1221
        %1223 = vmatmul.f32.gmra.mxu0 %v922
        %v1224 = vpop.f32.mrf.mxu0
        %v1225 = vadd.f32 0.0, %v1224
        %1226 = vmatmul.f32.gmra.mxu0 %v925
        %v1227 = vpop.f32.mrf.mxu0
        %v1228 = vadd.f32 0.0, %v1227
        %1229 = vmatmul.f32.gmra.mxu0 %v928
        %v1230 = vpop.f32.mrf.mxu0
        %v1231 = vadd.f32 0.0, %v1230
        %1232 = vmatmul.f32.gmra.mxu0 %v931
        %v1233 = vpop.f32.mrf.mxu0
        %v1234 = vadd.f32 0.0, %v1233
        %1235 = vdwg.mxu0
        %v1237 = vsel %vm896, %v548, 0
        %v1240 = vsel %vm896, %v549, 0
        %v1243 = vsel %vm896, %v550, 0
        %v1246 = vsel %vm896, %v551, 0
        %v1249 = vsel %vm896, %v552, 0
        %v1252 = vsel %vm896, %v553, 0
        %v1255 = vsel %vm896, %v554, 0
        %v1258 = vsel %vm896, %v555, 0
        %v1261 = vsel %vm896, %v556, 0
        %v1264 = vsel %vm896, %v557, 0
        %v1267 = vsel %vm896, %v558, 0
        %v1270 = vsel %vm896, %v559, 0
        %v1273 = vsel %vm896, %v656, 0
        %v1276 = vsel %vm896, %v657, 0
        %v1279 = vsel %vm896, %v658, 0
        %v1282 = vsel %vm896, %v659, 0
        %v1285 = vsel %vm896, %v660, 0
        %v1288 = vsel %vm896, %v661, 0
        %v1291 = vsel %vm896, %v662, 0
        %v1294 = vsel %vm896, %v663, 0
        %v1297 = vsel %vm896, %v664, 0
        %v1300 = vsel %vm896, %v665, 0
        %v1303 = vsel %vm896, %v666, 0
        %v1306 = vsel %vm896, %v667, 0
        %v1309 = vsel %vm896, %v668, 0
        %v1312 = vsel %vm896, %v669, 0
        %v1315 = vsel %vm896, %v670, 0
        %v1318 = vsel %vm896, %v671, 0
        %v1321 = vsel %vm896, %v672, 0
        %v1324 = vsel %vm896, %v673, 0
        %v1327 = vsel %vm896, %v674, 0
        %v1330 = vsel %vm896, %v675, 0
        %v1333 = vsel %vm896, %v676, 0
        %v1336 = vsel %vm896, %v677, 0
        %v1339 = vsel %vm896, %v678, 0
        %v1342 = vsel %vm896, %v679, 0
        %v1345 = vsel %vm896, %v680, 0
        %v1348 = vsel %vm896, %v681, 0
        %v1351 = vsel %vm896, %v682, 0
        %v1354 = vsel %vm896, %v683, 0
        %v1357 = vsel %vm896, %v684, 0
        %v1360 = vsel %vm896, %v685, 0
        %v1363 = vsel %vm896, %v686, 0
        %v1366 = vsel %vm896, %v687, 0
        %v1369 = vsel %vm896, %v688, 0
        %v1372 = vsel %vm896, %v689, 0
        %v1375 = vsel %vm896, %v690, 0
        %v1378 = vsel %vm896, %v691, 0
        %v1381 = vsel %vm896, %v692, 0
        %v1384 = vsel %vm896, %v693, 0
        %v1387 = vsel %vm896, %v694, 0
        %v1390 = vsel %vm896, %v695, 0
        %v1393 = vsel %vm896, %v696, 0
        %v1396 = vsel %vm896, %v697, 0
        %v1399 = vsel %vm896, %v698, 0
        %v1402 = vsel %vm896, %v699, 0
        %v1405 = vsel %vm896, %v700, 0
        %v1408 = vsel %vm896, %v701, 0
        %v1411 = vsel %vm896, %v702, 0
        %v1414 = vsel %vm896, %v703, 0
        %1416 = vmatpush.xpose.msra.mxu0 %v1318
        %1417 = vmatpush.xpose.msra.mxu0 %v1315
        %1418 = vmatpush.xpose.msra.mxu0 %v1312
        %1419 = vmatpush.xpose.msra.mxu0 %v1309
        %1420 = vmatpush.xpose.msra.mxu0 %v1306
        %1421 = vmatpush.xpose.msra.mxu0 %v1303
        %1422 = vmatpush.xpose.msra.mxu0 %v1300
        %1423 = vmatpush.xpose.msra.mxu0 %v1297
        %1424 = vmatpush.xpose.msra.mxu0 %v1294
        %1425 = vmatpush.xpose.msra.mxu0 %v1291
        %1426 = vmatpush.xpose.msra.mxu0 %v1288
        %1427 = vmatpush.xpose.msra.mxu0 %v1285
        %1428 = vmatpush.xpose.msra.mxu0 %v1282
        %1429 = vmatpush.xpose.msra.mxu0 %v1279
        %1430 = vmatpush.xpose.msra.mxu0 %v1276
        %1431 = vmatpush.xpose.msra.mxu0 %v1273
        %1432 = vmatmul.f32.gmra.mxu0 %v1237
        %v1433 = vpop.f32.mrf.mxu0
        %v1434 = vadd.f32 0.0, %v1433
        %1435 = vmatmul.f32.gmra.mxu0 %v1240
        %v1436 = vpop.f32.mrf.mxu0
        %v1437 = vadd.f32 0.0, %v1436
        %1438 = vmatmul.f32.gmra.mxu0 %v1243
        %v1439 = vpop.f32.mrf.mxu0
        %v1440 = vadd.f32 0.0, %v1439
        %1441 = vmatmul.f32.gmra.mxu0 %v1246
        %v1442 = vpop.f32.mrf.mxu0
        %v1443 = vadd.f32 0.0, %v1442
        %1444 = vmatmul.f32.gmra.mxu0 %v1249
        %v1445 = vpop.f32.mrf.mxu0
        %v1446 = vadd.f32 0.0, %v1445
        %1447 = vmatmul.f32.gmra.mxu0 %v1252
        %v1448 = vpop.f32.mrf.mxu0
        %v1449 = vadd.f32 0.0, %v1448
        %1450 = vmatmul.f32.gmra.mxu0 %v1255
        %v1451 = vpop.f32.mrf.mxu0
        %v1452 = vadd.f32 0.0, %v1451
        %1453 = vmatmul.f32.gmra.mxu0 %v1258
        %v1454 = vpop.f32.mrf.mxu0
        %v1455 = vadd.f32 0.0, %v1454
        %1456 = vmatmul.f32.gmra.mxu0 %v1261
        %v1457 = vpop.f32.mrf.mxu0
        %v1458 = vadd.f32 0.0, %v1457
        %1459 = vmatmul.f32.gmra.mxu0 %v1264
        %v1460 = vpop.f32.mrf.mxu0
        %v1461 = vadd.f32 0.0, %v1460
        %1462 = vmatmul.f32.gmra.mxu0 %v1267
        %v1463 = vpop.f32.mrf.mxu0
        %v1464 = vadd.f32 0.0, %v1463
        %1465 = vmatmul.f32.gmra.mxu0 %v1270
        %v1466 = vpop.f32.mrf.mxu0
        %v1467 = vadd.f32 0.0, %v1466
        %1468 = vdwg.mxu0
        %1469 = vmatpush.xpose.msra.mxu0 %v1366
        %1470 = vmatpush.xpose.msra.mxu0 %v1363
        %1471 = vmatpush.xpose.msra.mxu0 %v1360
        %1472 = vmatpush.xpose.msra.mxu0 %v1357
        %1473 = vmatpush.xpose.msra.mxu0 %v1354
        %1474 = vmatpush.xpose.msra.mxu0 %v1351
        %1475 = vmatpush.xpose.msra.mxu0 %v1348
        %1476 = vmatpush.xpose.msra.mxu0 %v1345
        %1477 = vmatpush.xpose.msra.mxu0 %v1342
        %1478 = vmatpush.xpose.msra.mxu0 %v1339
        %1479 = vmatpush.xpose.msra.mxu0 %v1336
        %1480 = vmatpush.xpose.msra.mxu0 %v1333
        %1481 = vmatpush.xpose.msra.mxu0 %v1330
        %1482 = vmatpush.xpose.msra.mxu0 %v1327
        %1483 = vmatpush.xpose.msra.mxu0 %v1324
        %1484 = vmatpush.xpose.msra.mxu0 %v1321
        %1485 = vmatmul.f32.gmra.mxu0 %v1237
        %v1486 = vpop.f32.mrf.mxu0
        %v1487 = vadd.f32 0.0, %v1486
        %1488 = vmatmul.f32.gmra.mxu0 %v1240
        %v1489 = vpop.f32.mrf.mxu0
        %v1490 = vadd.f32 0.0, %v1489
        %1491 = vmatmul.f32.gmra.mxu0 %v1243
        %v1492 = vpop.f32.mrf.mxu0
        %v1493 = vadd.f32 0.0, %v1492
        %1494 = vmatmul.f32.gmra.mxu0 %v1246
        %v1495 = vpop.f32.mrf.mxu0
        %v1496 = vadd.f32 0.0, %v1495
        %1497 = vmatmul.f32.gmra.mxu0 %v1249
        %v1498 = vpop.f32.mrf.mxu0
        %v1499 = vadd.f32 0.0, %v1498
        %1500 = vmatmul.f32.gmra.mxu0 %v1252
        %v1501 = vpop.f32.mrf.mxu0
        %v1502 = vadd.f32 0.0, %v1501
        %1503 = vmatmul.f32.gmra.mxu0 %v1255
        %v1504 = vpop.f32.mrf.mxu0
        %v1505 = vadd.f32 0.0, %v1504
        %1506 = vmatmul.f32.gmra.mxu0 %v1258
        %v1507 = vpop.f32.mrf.mxu0
        %v1508 = vadd.f32 0.0, %v1507
        %1509 = vmatmul.f32.gmra.mxu0 %v1261
        %v1510 = vpop.f32.mrf.mxu0
        %v1511 = vadd.f32 0.0, %v1510
        %1512 = vmatmul.f32.gmra.mxu0 %v1264
        %v1513 = vpop.f32.mrf.mxu0
        %v1514 = vadd.f32 0.0, %v1513
        %1515 = vmatmul.f32.gmra.mxu0 %v1267
        %v1516 = vpop.f32.mrf.mxu0
        %v1517 = vadd.f32 0.0, %v1516
        %1518 = vmatmul.f32.gmra.mxu0 %v1270
        %v1519 = vpop.f32.mrf.mxu0
        %v1520 = vadd.f32 0.0, %v1519
        %1521 = vdwg.mxu0
        %1522 = vmatpush.xpose.msra.mxu0 %v1414
        %1523 = vmatpush.xpose.msra.mxu0 %v1411
        %1524 = vmatpush.xpose.msra.mxu0 %v1408
        %1525 = vmatpush.xpose.msra.mxu0 %v1405
        %1526 = vmatpush.xpose.msra.mxu0 %v1402
        %1527 = vmatpush.xpose.msra.mxu0 %v1399
        %1528 = vmatpush.xpose.msra.mxu0 %v1396
        %1529 = vmatpush.xpose.msra.mxu0 %v1393
        %1530 = vmatpush.xpose.msra.mxu0 %v1390
        %1531 = vmatpush.xpose.msra.mxu0 %v1387
        %1532 = vmatpush.xpose.msra.mxu0 %v1384
        %1533 = vmatpush.xpose.msra.mxu0 %v1381
        %1534 = vmatpush.xpose.msra.mxu0 %v1378
        %1535 = vmatpush.xpose.msra.mxu0 %v1375
        %1536 = vmatpush.xpose.msra.mxu0 %v1372
        %1537 = vmatpush.xpose.msra.mxu0 %v1369
        %1538 = vmatmul.f32.gmra.mxu0 %v1237
        %v1539 = vpop.f32.mrf.mxu0
        %v1540 = vadd.f32 0.0, %v1539
        %1541 = vmatmul.f32.gmra.mxu0 %v1240
        %v1542 = vpop.f32.mrf.mxu0
        %v1543 = vadd.f32 0.0, %v1542
        %1544 = vmatmul.f32.gmra.mxu0 %v1243
        %v1545 = vpop.f32.mrf.mxu0
        %v1546 = vadd.f32 0.0, %v1545
        %1547 = vmatmul.f32.gmra.mxu0 %v1246
        %v1548 = vpop.f32.mrf.mxu0
        %v1549 = vadd.f32 0.0, %v1548
        %1550 = vmatmul.f32.gmra.mxu0 %v1249
        %v1551 = vpop.f32.mrf.mxu0
        %v1552 = vadd.f32 0.0, %v1551
        %1553 = vmatmul.f32.gmra.mxu0 %v1252
        %v1554 = vpop.f32.mrf.mxu0
        %v1555 = vadd.f32 0.0, %v1554
        %1556 = vmatmul.f32.gmra.mxu0 %v1255
        %v1557 = vpop.f32.mrf.mxu0
        %v1558 = vadd.f32 0.0, %v1557
        %1559 = vmatmul.f32.gmra.mxu0 %v1258
        %v1560 = vpop.f32.mrf.mxu0
        %v1561 = vadd.f32 0.0, %v1560
        %1562 = vmatmul.f32.gmra.mxu0 %v1261
        %v1563 = vpop.f32.mrf.mxu0
        %v1564 = vadd.f32 0.0, %v1563
        %1565 = vmatmul.f32.gmra.mxu0 %v1264
        %v1566 = vpop.f32.mrf.mxu0
        %v1567 = vadd.f32 0.0, %v1566
        %1568 = vmatmul.f32.gmra.mxu0 %v1267
        %v1569 = vpop.f32.mrf.mxu0
        %v1570 = vadd.f32 0.0, %v1569
        %1571 = vmatmul.f32.gmra.mxu0 %v1270
        %v1572 = vpop.f32.mrf.mxu0
        %v1573 = vadd.f32 0.0, %v1572
        %1574 = vdwg.mxu0
        %v1576 = vsel %vm896, %v560, 0
        %v1579 = vsel %vm896, %v561, 0
        %v1582 = vsel %vm896, %v562, 0
        %v1585 = vsel %vm896, %v563, 0
        %v1588 = vsel %vm896, %v564, 0
        %v1591 = vsel %vm896, %v565, 0
        %v1594 = vsel %vm896, %v566, 0
        %v1597 = vsel %vm896, %v567, 0
        %v1600 = vsel %vm896, %v568, 0
        %v1603 = vsel %vm896, %v569, 0
        %v1606 = vsel %vm896, %v570, 0
        %v1609 = vsel %vm896, %v571, 0
        %v1612 = vsel %vm896, %v704, 0
        %v1615 = vsel %vm896, %v705, 0
        %v1618 = vsel %vm896, %v706, 0
        %v1621 = vsel %vm896, %v707, 0
        %v1624 = vsel %vm896, %v708, 0
        %v1627 = vsel %vm896, %v709, 0
        %v1630 = vsel %vm896, %v710, 0
        %v1633 = vsel %vm896, %v711, 0
        %v1636 = vsel %vm896, %v712, 0
        %v1639 = vsel %vm896, %v713, 0
        %v1642 = vsel %vm896, %v714, 0
        %v1645 = vsel %vm896, %v715, 0
        %v1648 = vsel %vm896, %v716, 0
        %v1651 = vsel %vm896, %v717, 0
        %v1654 = vsel %vm896, %v718, 0
        %v1657 = vsel %vm896, %v719, 0
        %v1660 = vsel %vm896, %v720, 0
        %v1663 = vsel %vm896, %v721, 0
        %v1666 = vsel %vm896, %v722, 0
        %v1669 = vsel %vm896, %v723, 0
        %v1672 = vsel %vm896, %v724, 0
        %v1675 = vsel %vm896, %v725, 0
        %v1678 = vsel %vm896, %v726, 0
        %v1681 = vsel %vm896, %v727, 0
        %v1684 = vsel %vm896, %v728, 0
        %v1687 = vsel %vm896, %v729, 0
        %v1690 = vsel %vm896, %v730, 0
        %v1693 = vsel %vm896, %v731, 0
        %v1696 = vsel %vm896, %v732, 0
        %v1699 = vsel %vm896, %v733, 0
        %v1702 = vsel %vm896, %v734, 0
        %v1705 = vsel %vm896, %v735, 0
        %v1708 = vsel %vm896, %v736, 0
        %v1711 = vsel %vm896, %v737, 0
        %v1714 = vsel %vm896, %v738, 0
        %v1717 = vsel %vm896, %v739, 0
        %v1720 = vsel %vm896, %v740, 0
        %v1723 = vsel %vm896, %v741, 0
        %v1726 = vsel %vm896, %v742, 0
        %v1729 = vsel %vm896, %v743, 0
        %v1732 = vsel %vm896, %v744, 0
        %v1735 = vsel %vm896, %v745, 0
        %v1738 = vsel %vm896, %v746, 0
        %v1741 = vsel %vm896, %v747, 0
        %v1744 = vsel %vm896, %v748, 0
        %v1747 = vsel %vm896, %v749, 0
        %v1750 = vsel %vm896, %v750, 0
        %v1753 = vsel %vm896, %v751, 0
        %1755 = vmatpush.xpose.msra.mxu0 %v1657
        %1756 = vmatpush.xpose.msra.mxu0 %v1654
        %1757 = vmatpush.xpose.msra.mxu0 %v1651
        %1758 = vmatpush.xpose.msra.mxu0 %v1648
        %1759 = vmatpush.xpose.msra.mxu0 %v1645
        %1760 = vmatpush.xpose.msra.mxu0 %v1642
        %1761 = vmatpush.xpose.msra.mxu0 %v1639
        %1762 = vmatpush.xpose.msra.mxu0 %v1636
        %1763 = vmatpush.xpose.msra.mxu0 %v1633
        %1764 = vmatpush.xpose.msra.mxu0 %v1630
        %1765 = vmatpush.xpose.msra.mxu0 %v1627
        %1766 = vmatpush.xpose.msra.mxu0 %v1624
        %1767 = vmatpush.xpose.msra.mxu0 %v1621
        %1768 = vmatpush.xpose.msra.mxu0 %v1618
        %1769 = vmatpush.xpose.msra.mxu0 %v1615
        %1770 = vmatpush.xpose.msra.mxu0 %v1612
        %1771 = vmatmul.f32.gmra.mxu0 %v1576
        %v1772 = vpop.f32.mrf.mxu0
        %v1773 = vadd.f32 0.0, %v1772
        %1774 = vmatmul.f32.gmra.mxu0 %v1579
        %v1775 = vpop.f32.mrf.mxu0
        %v1776 = vadd.f32 0.0, %v1775
        %1777 = vmatmul.f32.gmra.mxu0 %v1582
        %v1778 = vpop.f32.mrf.mxu0
        %v1779 = vadd.f32 0.0, %v1778
        %1780 = vmatmul.f32.gmra.mxu0 %v1585
        %v1781 = vpop.f32.mrf.mxu0
        %v1782 = vadd.f32 0.0, %v1781
        %1783 = vmatmul.f32.gmra.mxu0 %v1588
        %v1784 = vpop.f32.mrf.mxu0
        %v1785 = vadd.f32 0.0, %v1784
        %1786 = vmatmul.f32.gmra.mxu0 %v1591
        %v1787 = vpop.f32.mrf.mxu0
        %v1788 = vadd.f32 0.0, %v1787
        %1789 = vmatmul.f32.gmra.mxu0 %v1594
        %v1790 = vpop.f32.mrf.mxu0
        %v1791 = vadd.f32 0.0, %v1790
        %1792 = vmatmul.f32.gmra.mxu0 %v1597
        %v1793 = vpop.f32.mrf.mxu0
        %v1794 = vadd.f32 0.0, %v1793
        %1795 = vmatmul.f32.gmra.mxu0 %v1600
        %v1796 = vpop.f32.mrf.mxu0
        %v1797 = vadd.f32 0.0, %v1796
        %1798 = vmatmul.f32.gmra.mxu0 %v1603
        %v1799 = vpop.f32.mrf.mxu0
        %v1800 = vadd.f32 0.0, %v1799
        %1801 = vmatmul.f32.gmra.mxu0 %v1606
        %v1802 = vpop.f32.mrf.mxu0
        %v1803 = vadd.f32 0.0, %v1802
        %1804 = vmatmul.f32.gmra.mxu0 %v1609
        %v1805 = vpop.f32.mrf.mxu0
        %v1806 = vadd.f32 0.0, %v1805
        %1807 = vdwg.mxu0
        %1808 = vmatpush.xpose.msra.mxu0 %v1705
        %1809 = vmatpush.xpose.msra.mxu0 %v1702
        %1810 = vmatpush.xpose.msra.mxu0 %v1699
        %1811 = vmatpush.xpose.msra.mxu0 %v1696
        %1812 = vmatpush.xpose.msra.mxu0 %v1693
        %1813 = vmatpush.xpose.msra.mxu0 %v1690
        %1814 = vmatpush.xpose.msra.mxu0 %v1687
        %1815 = vmatpush.xpose.msra.mxu0 %v1684
        %1816 = vmatpush.xpose.msra.mxu0 %v1681
        %1817 = vmatpush.xpose.msra.mxu0 %v1678
        %1818 = vmatpush.xpose.msra.mxu0 %v1675
        %1819 = vmatpush.xpose.msra.mxu0 %v1672
        %1820 = vmatpush.xpose.msra.mxu0 %v1669
        %1821 = vmatpush.xpose.msra.mxu0 %v1666
        %1822 = vmatpush.xpose.msra.mxu0 %v1663
        %1823 = vmatpush.xpose.msra.mxu0 %v1660
        %1824 = vmatmul.f32.gmra.mxu0 %v1576
        %v1825 = vpop.f32.mrf.mxu0
        %v1826 = vadd.f32 0.0, %v1825
        %1827 = vmatmul.f32.gmra.mxu0 %v1579
        %v1828 = vpop.f32.mrf.mxu0
        %v1829 = vadd.f32 0.0, %v1828
        %1830 = vmatmul.f32.gmra.mxu0 %v1582
        %v1831 = vpop.f32.mrf.mxu0
        %v1832 = vadd.f32 0.0, %v1831
        %1833 = vmatmul.f32.gmra.mxu0 %v1585
        %v1834 = vpop.f32.mrf.mxu0
        %v1835 = vadd.f32 0.0, %v1834
        %1836 = vmatmul.f32.gmra.mxu0 %v1588
        %v1837 = vpop.f32.mrf.mxu0
        %v1838 = vadd.f32 0.0, %v1837
        %1839 = vmatmul.f32.gmra.mxu0 %v1591
        %v1840 = vpop.f32.mrf.mxu0
        %v1841 = vadd.f32 0.0, %v1840
        %1842 = vmatmul.f32.gmra.mxu0 %v1594
        %v1843 = vpop.f32.mrf.mxu0
        %v1844 = vadd.f32 0.0, %v1843
        %1845 = vmatmul.f32.gmra.mxu0 %v1597
        %v1846 = vpop.f32.mrf.mxu0
        %v1847 = vadd.f32 0.0, %v1846
        %1848 = vmatmul.f32.gmra.mxu0 %v1600
        %v1849 = vpop.f32.mrf.mxu0
        %v1850 = vadd.f32 0.0, %v1849
        %1851 = vmatmul.f32.gmra.mxu0 %v1603
        %v1852 = vpop.f32.mrf.mxu0
        %v1853 = vadd.f32 0.0, %v1852
        %1854 = vmatmul.f32.gmra.mxu0 %v1606
        %v1855 = vpop.f32.mrf.mxu0
        %v1856 = vadd.f32 0.0, %v1855
        %1857 = vmatmul.f32.gmra.mxu0 %v1609
        %v1858 = vpop.f32.mrf.mxu0
        %v1859 = vadd.f32 0.0, %v1858
        %1860 = vdwg.mxu0
        %1861 = vmatpush.xpose.msra.mxu0 %v1753
        %1862 = vmatpush.xpose.msra.mxu0 %v1750
        %1863 = vmatpush.xpose.msra.mxu0 %v1747
        %1864 = vmatpush.xpose.msra.mxu0 %v1744
        %1865 = vmatpush.xpose.msra.mxu0 %v1741
        %1866 = vmatpush.xpose.msra.mxu0 %v1738
        %1867 = vmatpush.xpose.msra.mxu0 %v1735
        %1868 = vmatpush.xpose.msra.mxu0 %v1732
        %1869 = vmatpush.xpose.msra.mxu0 %v1729
        %1870 = vmatpush.xpose.msra.mxu0 %v1726
        %1871 = vmatpush.xpose.msra.mxu0 %v1723
        %1872 = vmatpush.xpose.msra.mxu0 %v1720
        %1873 = vmatpush.xpose.msra.mxu0 %v1717
        %1874 = vmatpush.xpose.msra.mxu0 %v1714
        %1875 = vmatpush.xpose.msra.mxu0 %v1711
        %1876 = vmatpush.xpose.msra.mxu0 %v1708
        %1877 = vmatmul.f32.gmra.mxu0 %v1576
        %v1878 = vpop.f32.mrf.mxu0
        %v1879 = vadd.f32 0.0, %v1878
        %1880 = vmatmul.f32.gmra.mxu0 %v1579
        %v1881 = vpop.f32.mrf.mxu0
        %v1882 = vadd.f32 0.0, %v1881
        %1883 = vmatmul.f32.gmra.mxu0 %v1582
        %v1884 = vpop.f32.mrf.mxu0
        %v1885 = vadd.f32 0.0, %v1884
        %1886 = vmatmul.f32.gmra.mxu0 %v1585
        %v1887 = vpop.f32.mrf.mxu0
        %v1888 = vadd.f32 0.0, %v1887
        %1889 = vmatmul.f32.gmra.mxu0 %v1588
        %v1890 = vpop.f32.mrf.mxu0
        %v1891 = vadd.f32 0.0, %v1890
        %1892 = vmatmul.f32.gmra.mxu0 %v1591
        %v1893 = vpop.f32.mrf.mxu0
        %v1894 = vadd.f32 0.0, %v1893
        %1895 = vmatmul.f32.gmra.mxu0 %v1594
        %v1896 = vpop.f32.mrf.mxu0
        %v1897 = vadd.f32 0.0, %v1896
        %1898 = vmatmul.f32.gmra.mxu0 %v1597
        %v1899 = vpop.f32.mrf.mxu0
        %v1900 = vadd.f32 0.0, %v1899
        %1901 = vmatmul.f32.gmra.mxu0 %v1600
        %v1902 = vpop.f32.mrf.mxu0
        %v1903 = vadd.f32 0.0, %v1902
        %1904 = vmatmul.f32.gmra.mxu0 %v1603
        %v1905 = vpop.f32.mrf.mxu0
        %v1906 = vadd.f32 0.0, %v1905
        %1907 = vmatmul.f32.gmra.mxu0 %v1606
        %v1908 = vpop.f32.mrf.mxu0
        %v1909 = vadd.f32 0.0, %v1908
        %1910 = vmatmul.f32.gmra.mxu0 %v1609
        %v1911 = vpop.f32.mrf.mxu0
        %v1912 = vadd.f32 0.0, %v1911
        %1913 = vdwg.mxu0
        %v1915 = vsel %vm896, %v572, 0
        %v1918 = vsel %vm896, %v573, 0
        %v1921 = vsel %vm896, %v574, 0
        %v1924 = vsel %vm896, %v575, 0
        %v1927 = vsel %vm896, %v576, 0
        %v1930 = vsel %vm896, %v577, 0
        %v1933 = vsel %vm896, %v578, 0
        %v1936 = vsel %vm896, %v579, 0
        %v1939 = vsel %vm896, %v580, 0
        %v1942 = vsel %vm896, %v581, 0
        %v1945 = vsel %vm896, %v582, 0
        %v1948 = vsel %vm896, %v583, 0
        %v1951 = vsel %vm896, %v752, 0
        %v1954 = vsel %vm896, %v753, 0
        %v1957 = vsel %vm896, %v754, 0
        %v1960 = vsel %vm896, %v755, 0
        %v1963 = vsel %vm896, %v756, 0
        %v1966 = vsel %vm896, %v757, 0
        %v1969 = vsel %vm896, %v758, 0
        %v1972 = vsel %vm896, %v759, 0
        %v1975 = vsel %vm896, %v760, 0
        %v1978 = vsel %vm896, %v761, 0
        %v1981 = vsel %vm896, %v762, 0
        %v1984 = vsel %vm896, %v763, 0
        %v1987 = vsel %vm896, %v764, 0
        %v1990 = vsel %vm896, %v765, 0
        %v1993 = vsel %vm896, %v766, 0
        %v1996 = vsel %vm896, %v767, 0
        %v1999 = vsel %vm896, %v768, 0
        %v2002 = vsel %vm896, %v769, 0
        %v2005 = vsel %vm896, %v770, 0
        %v2008 = vsel %vm896, %v771, 0
        %v2011 = vsel %vm896, %v772, 0
        %v2014 = vsel %vm896, %v773, 0
        %v2017 = vsel %vm896, %v774, 0
        %v2020 = vsel %vm896, %v775, 0
        %v2023 = vsel %vm896, %v776, 0
        %v2026 = vsel %vm896, %v777, 0
        %v2029 = vsel %vm896, %v778, 0
        %v2032 = vsel %vm896, %v779, 0
        %v2035 = vsel %vm896, %v780, 0
        %v2038 = vsel %vm896, %v781, 0
        %v2041 = vsel %vm896, %v782, 0
        %v2044 = vsel %vm896, %v783, 0
        %v2047 = vsel %vm896, %v784, 0
        %v2050 = vsel %vm896, %v785, 0
        %v2053 = vsel %vm896, %v786, 0
        %v2056 = vsel %vm896, %v787, 0
        %v2059 = vsel %vm896, %v788, 0
        %v2062 = vsel %vm896, %v789, 0
        %v2065 = vsel %vm896, %v790, 0
        %v2068 = vsel %vm896, %v791, 0
        %v2071 = vsel %vm896, %v792, 0
        %v2074 = vsel %vm896, %v793, 0
        %v2077 = vsel %vm896, %v794, 0
        %v2080 = vsel %vm896, %v795, 0
        %v2083 = vsel %vm896, %v796, 0
        %v2086 = vsel %vm896, %v797, 0
        %v2089 = vsel %vm896, %v798, 0
        %v2092 = vsel %vm896, %v799, 0
        %2094 = vmatpush.xpose.msra.mxu0 %v1996
        %2095 = vmatpush.xpose.msra.mxu0 %v1993
        %2096 = vmatpush.xpose.msra.mxu0 %v1990
        %2097 = vmatpush.xpose.msra.mxu0 %v1987
        %2098 = vmatpush.xpose.msra.mxu0 %v1984
        %2099 = vmatpush.xpose.msra.mxu0 %v1981
        %2100 = vmatpush.xpose.msra.mxu0 %v1978
        %2101 = vmatpush.xpose.msra.mxu0 %v1975
        %2102 = vmatpush.xpose.msra.mxu0 %v1972
        %2103 = vmatpush.xpose.msra.mxu0 %v1969
        %2104 = vmatpush.xpose.msra.mxu0 %v1966
        %2105 = vmatpush.xpose.msra.mxu0 %v1963
        %2106 = vmatpush.xpose.msra.mxu0 %v1960
        %2107 = vmatpush.xpose.msra.mxu0 %v1957
        %2108 = vmatpush.xpose.msra.mxu0 %v1954
        %2109 = vmatpush.xpose.msra.mxu0 %v1951
        %2110 = vmatmul.f32.gmra.mxu0 %v1915
        %v2111 = vpop.f32.mrf.mxu0
        %v2112 = vadd.f32 0.0, %v2111
        %2113 = vmatmul.f32.gmra.mxu0 %v1918
        %v2114 = vpop.f32.mrf.mxu0
        %v2115 = vadd.f32 0.0, %v2114
        %2116 = vmatmul.f32.gmra.mxu0 %v1921
        %v2117 = vpop.f32.mrf.mxu0
        %v2118 = vadd.f32 0.0, %v2117
        %2119 = vmatmul.f32.gmra.mxu0 %v1924
        %v2120 = vpop.f32.mrf.mxu0
        %v2121 = vadd.f32 0.0, %v2120
        %2122 = vmatmul.f32.gmra.mxu0 %v1927
        %v2123 = vpop.f32.mrf.mxu0
        %v2124 = vadd.f32 0.0, %v2123
        %2125 = vmatmul.f32.gmra.mxu0 %v1930
        %v2126 = vpop.f32.mrf.mxu0
        %v2127 = vadd.f32 0.0, %v2126
        %2128 = vmatmul.f32.gmra.mxu0 %v1933
        %v2129 = vpop.f32.mrf.mxu0
        %v2130 = vadd.f32 0.0, %v2129
        %2131 = vmatmul.f32.gmra.mxu0 %v1936
        %v2132 = vpop.f32.mrf.mxu0
        %v2133 = vadd.f32 0.0, %v2132
        %2134 = vmatmul.f32.gmra.mxu0 %v1939
        %v2135 = vpop.f32.mrf.mxu0
        %v2136 = vadd.f32 0.0, %v2135
        %2137 = vmatmul.f32.gmra.mxu0 %v1942
        %v2138 = vpop.f32.mrf.mxu0
        %v2139 = vadd.f32 0.0, %v2138
        %2140 = vmatmul.f32.gmra.mxu0 %v1945
        %v2141 = vpop.f32.mrf.mxu0
        %v2142 = vadd.f32 0.0, %v2141
        %2143 = vmatmul.f32.gmra.mxu0 %v1948
        %v2144 = vpop.f32.mrf.mxu0
        %v2145 = vadd.f32 0.0, %v2144
        %2146 = vdwg.mxu0
        %2147 = vmatpush.xpose.msra.mxu0 %v2044
        %2148 = vmatpush.xpose.msra.mxu0 %v2041
        %2149 = vmatpush.xpose.msra.mxu0 %v2038
        %2150 = vmatpush.xpose.msra.mxu0 %v2035
        %2151 = vmatpush.xpose.msra.mxu0 %v2032
        %2152 = vmatpush.xpose.msra.mxu0 %v2029
        %2153 = vmatpush.xpose.msra.mxu0 %v2026
        %2154 = vmatpush.xpose.msra.mxu0 %v2023
        %2155 = vmatpush.xpose.msra.mxu0 %v2020
        %2156 = vmatpush.xpose.msra.mxu0 %v2017
        %2157 = vmatpush.xpose.msra.mxu0 %v2014
        %2158 = vmatpush.xpose.msra.mxu0 %v2011
        %2159 = vmatpush.xpose.msra.mxu0 %v2008
        %2160 = vmatpush.xpose.msra.mxu0 %v2005
        %2161 = vmatpush.xpose.msra.mxu0 %v2002
        %2162 = vmatpush.xpose.msra.mxu0 %v1999
        %2163 = vmatmul.f32.gmra.mxu0 %v1915
        %v2164 = vpop.f32.mrf.mxu0
        %v2165 = vadd.f32 0.0, %v2164
        %2166 = vmatmul.f32.gmra.mxu0 %v1918
        %v2167 = vpop.f32.mrf.mxu0
        %v2168 = vadd.f32 0.0, %v2167
        %2169 = vmatmul.f32.gmra.mxu0 %v1921
        %v2170 = vpop.f32.mrf.mxu0
        %v2171 = vadd.f32 0.0, %v2170
        %2172 = vmatmul.f32.gmra.mxu0 %v1924
        %v2173 = vpop.f32.mrf.mxu0
        %v2174 = vadd.f32 0.0, %v2173
        %2175 = vmatmul.f32.gmra.mxu0 %v1927
        %v2176 = vpop.f32.mrf.mxu0
        %v2177 = vadd.f32 0.0, %v2176
        %2178 = vmatmul.f32.gmra.mxu0 %v1930
        %v2179 = vpop.f32.mrf.mxu0
        %v2180 = vadd.f32 0.0, %v2179
        %2181 = vmatmul.f32.gmra.mxu0 %v1933
        %v2182 = vpop.f32.mrf.mxu0
        %v2183 = vadd.f32 0.0, %v2182
        %2184 = vmatmul.f32.gmra.mxu0 %v1936
        %v2185 = vpop.f32.mrf.mxu0
        %v2186 = vadd.f32 0.0, %v2185
        %2187 = vmatmul.f32.gmra.mxu0 %v1939
        %v2188 = vpop.f32.mrf.mxu0
        %v2189 = vadd.f32 0.0, %v2188
        %2190 = vmatmul.f32.gmra.mxu0 %v1942
        %v2191 = vpop.f32.mrf.mxu0
        %v2192 = vadd.f32 0.0, %v2191
        %2193 = vmatmul.f32.gmra.mxu0 %v1945
        %v2194 = vpop.f32.mrf.mxu0
        %v2195 = vadd.f32 0.0, %v2194
        %2196 = vmatmul.f32.gmra.mxu0 %v1948
        %v2197 = vpop.f32.mrf.mxu0
        %v2198 = vadd.f32 0.0, %v2197
        %2199 = vdwg.mxu0
        %2200 = vmatpush.xpose.msra.mxu0 %v2092
        %2201 = vmatpush.xpose.msra.mxu0 %v2089
        %2202 = vmatpush.xpose.msra.mxu0 %v2086
        %2203 = vmatpush.xpose.msra.mxu0 %v2083
        %2204 = vmatpush.xpose.msra.mxu0 %v2080
        %2205 = vmatpush.xpose.msra.mxu0 %v2077
        %2206 = vmatpush.xpose.msra.mxu0 %v2074
        %2207 = vmatpush.xpose.msra.mxu0 %v2071
        %2208 = vmatpush.xpose.msra.mxu0 %v2068
        %2209 = vmatpush.xpose.msra.mxu0 %v2065
        %2210 = vmatpush.xpose.msra.mxu0 %v2062
        %2211 = vmatpush.xpose.msra.mxu0 %v2059
        %2212 = vmatpush.xpose.msra.mxu0 %v2056
        %2213 = vmatpush.xpose.msra.mxu0 %v2053
        %2214 = vmatpush.xpose.msra.mxu0 %v2050
        %2215 = vmatpush.xpose.msra.mxu0 %v2047
        %2216 = vmatmul.f32.gmra.mxu0 %v1915
        %v2217 = vpop.f32.mrf.mxu0
        %v2218 = vadd.f32 0.0, %v2217
        %2219 = vmatmul.f32.gmra.mxu0 %v1918
        %v2220 = vpop.f32.mrf.mxu0
        %v2221 = vadd.f32 0.0, %v2220
        %2222 = vmatmul.f32.gmra.mxu0 %v1921
        %v2223 = vpop.f32.mrf.mxu0
        %v2224 = vadd.f32 0.0, %v2223
        %2225 = vmatmul.f32.gmra.mxu0 %v1924
        %v2226 = vpop.f32.mrf.mxu0
        %v2227 = vadd.f32 0.0, %v2226
        %2228 = vmatmul.f32.gmra.mxu0 %v1927
        %v2229 = vpop.f32.mrf.mxu0
        %v2230 = vadd.f32 0.0, %v2229
        %2231 = vmatmul.f32.gmra.mxu0 %v1930
        %v2232 = vpop.f32.mrf.mxu0
        %v2233 = vadd.f32 0.0, %v2232
        %2234 = vmatmul.f32.gmra.mxu0 %v1933
        %v2235 = vpop.f32.mrf.mxu0
        %v2236 = vadd.f32 0.0, %v2235
        %2237 = vmatmul.f32.gmra.mxu0 %v1936
        %v2238 = vpop.f32.mrf.mxu0
        %v2239 = vadd.f32 0.0, %v2238
        %2240 = vmatmul.f32.gmra.mxu0 %v1939
        %v2241 = vpop.f32.mrf.mxu0
        %v2242 = vadd.f32 0.0, %v2241
        %2243 = vmatmul.f32.gmra.mxu0 %v1942
        %v2244 = vpop.f32.mrf.mxu0
        %v2245 = vadd.f32 0.0, %v2244
        %2246 = vmatmul.f32.gmra.mxu0 %v1945
        %v2247 = vpop.f32.mrf.mxu0
        %v2248 = vadd.f32 0.0, %v2247
        %2249 = vmatmul.f32.gmra.mxu0 %v1948
        %v2250 = vpop.f32.mrf.mxu0
        %v2251 = vadd.f32 0.0, %v2250
        %2252 = vdwg.mxu0
        %v2254 = vsel %vm896, %v584, 0
        %v2257 = vsel %vm896, %v585, 0
        %v2260 = vsel %vm896, %v586, 0
        %v2263 = vsel %vm896, %v587, 0
        %v2266 = vsel %vm896, %v588, 0
        %v2269 = vsel %vm896, %v589, 0
        %v2272 = vsel %vm896, %v590, 0
        %v2275 = vsel %vm896, %v591, 0
        %v2278 = vsel %vm896, %v592, 0
        %v2281 = vsel %vm896, %v593, 0
        %v2284 = vsel %vm896, %v594, 0
        %v2287 = vsel %vm896, %v595, 0
        %v2290 = vsel %vm896, %v800, 0
        %v2293 = vsel %vm896, %v801, 0
        %v2296 = vsel %vm896, %v802, 0
        %v2299 = vsel %vm896, %v803, 0
        %v2302 = vsel %vm896, %v804, 0
        %v2305 = vsel %vm896, %v805, 0
        %v2308 = vsel %vm896, %v806, 0
        %v2311 = vsel %vm896, %v807, 0
        %v2314 = vsel %vm896, %v808, 0
        %v2317 = vsel %vm896, %v809, 0
        %v2320 = vsel %vm896, %v810, 0
        %v2323 = vsel %vm896, %v811, 0
        %v2326 = vsel %vm896, %v812, 0
        %v2329 = vsel %vm896, %v813, 0
        %v2332 = vsel %vm896, %v814, 0
        %v2335 = vsel %vm896, %v815, 0
        %v2338 = vsel %vm896, %v816, 0
        %v2341 = vsel %vm896, %v817, 0
        %v2344 = vsel %vm896, %v818, 0
        %v2347 = vsel %vm896, %v819, 0
        %v2350 = vsel %vm896, %v820, 0
        %v2353 = vsel %vm896, %v821, 0
        %v2356 = vsel %vm896, %v822, 0
        %v2359 = vsel %vm896, %v823, 0
        %v2362 = vsel %vm896, %v824, 0
        %v2365 = vsel %vm896, %v825, 0
        %v2368 = vsel %vm896, %v826, 0
        %v2371 = vsel %vm896, %v827, 0
        %v2374 = vsel %vm896, %v828, 0
        %v2377 = vsel %vm896, %v829, 0
        %v2380 = vsel %vm896, %v830, 0
        %v2383 = vsel %vm896, %v831, 0
        %v2386 = vsel %vm896, %v832, 0
        %v2389 = vsel %vm896, %v833, 0
        %v2392 = vsel %vm896, %v834, 0
        %v2395 = vsel %vm896, %v835, 0
        %v2398 = vsel %vm896, %v836, 0
        %v2401 = vsel %vm896, %v837, 0
        %v2404 = vsel %vm896, %v838, 0
        %v2407 = vsel %vm896, %v839, 0
        %v2410 = vsel %vm896, %v840, 0
        %v2413 = vsel %vm896, %v841, 0
        %v2416 = vsel %vm896, %v842, 0
        %v2419 = vsel %vm896, %v843, 0
        %v2422 = vsel %vm896, %v844, 0
        %v2425 = vsel %vm896, %v845, 0
        %v2428 = vsel %vm896, %v846, 0
        %v2431 = vsel %vm896, %v847, 0
        %2433 = vmatpush.xpose.msra.mxu0 %v2335
        %2434 = vmatpush.xpose.msra.mxu0 %v2332
        %2435 = vmatpush.xpose.msra.mxu0 %v2329
        %2436 = vmatpush.xpose.msra.mxu0 %v2326
        %2437 = vmatpush.xpose.msra.mxu0 %v2323
        %2438 = vmatpush.xpose.msra.mxu0 %v2320
        %2439 = vmatpush.xpose.msra.mxu0 %v2317
        %2440 = vmatpush.xpose.msra.mxu0 %v2314
        %2441 = vmatpush.xpose.msra.mxu0 %v2311
        %2442 = vmatpush.xpose.msra.mxu0 %v2308
        %2443 = vmatpush.xpose.msra.mxu0 %v2305
        %2444 = vmatpush.xpose.msra.mxu0 %v2302
        %2445 = vmatpush.xpose.msra.mxu0 %v2299
        %2446 = vmatpush.xpose.msra.mxu0 %v2296
        %2447 = vmatpush.xpose.msra.mxu0 %v2293
        %2448 = vmatpush.xpose.msra.mxu0 %v2290
        %2449 = vmatmul.f32.gmra.mxu0 %v2254
        %v2450 = vpop.f32.mrf.mxu0
        %v2451 = vadd.f32 0.0, %v2450
        %2452 = vmatmul.f32.gmra.mxu0 %v2257
        %v2453 = vpop.f32.mrf.mxu0
        %v2454 = vadd.f32 0.0, %v2453
        %2455 = vmatmul.f32.gmra.mxu0 %v2260
        %v2456 = vpop.f32.mrf.mxu0
        %v2457 = vadd.f32 0.0, %v2456
        %2458 = vmatmul.f32.gmra.mxu0 %v2263
        %v2459 = vpop.f32.mrf.mxu0
        %v2460 = vadd.f32 0.0, %v2459
        %2461 = vmatmul.f32.gmra.mxu0 %v2266
        %v2462 = vpop.f32.mrf.mxu0
        %v2463 = vadd.f32 0.0, %v2462
        %2464 = vmatmul.f32.gmra.mxu0 %v2269
        %v2465 = vpop.f32.mrf.mxu0
        %v2466 = vadd.f32 0.0, %v2465
        %2467 = vmatmul.f32.gmra.mxu0 %v2272
        %v2468 = vpop.f32.mrf.mxu0
        %v2469 = vadd.f32 0.0, %v2468
        %2470 = vmatmul.f32.gmra.mxu0 %v2275
        %v2471 = vpop.f32.mrf.mxu0
        %v2472 = vadd.f32 0.0, %v2471
        %2473 = vmatmul.f32.gmra.mxu0 %v2278
        %v2474 = vpop.f32.mrf.mxu0
        %v2475 = vadd.f32 0.0, %v2474
        %2476 = vmatmul.f32.gmra.mxu0 %v2281
        %v2477 = vpop.f32.mrf.mxu0
        %v2478 = vadd.f32 0.0, %v2477
        %2479 = vmatmul.f32.gmra.mxu0 %v2284
        %v2480 = vpop.f32.mrf.mxu0
        %v2481 = vadd.f32 0.0, %v2480
        %2482 = vmatmul.f32.gmra.mxu0 %v2287
        %v2483 = vpop.f32.mrf.mxu0
        %v2484 = vadd.f32 0.0, %v2483
        %2485 = vdwg.mxu0
        %2486 = vmatpush.xpose.msra.mxu0 %v2383
        %2487 = vmatpush.xpose.msra.mxu0 %v2380
        %2488 = vmatpush.xpose.msra.mxu0 %v2377
        %2489 = vmatpush.xpose.msra.mxu0 %v2374
        %2490 = vmatpush.xpose.msra.mxu0 %v2371
        %2491 = vmatpush.xpose.msra.mxu0 %v2368
        %2492 = vmatpush.xpose.msra.mxu0 %v2365
        %2493 = vmatpush.xpose.msra.mxu0 %v2362
        %2494 = vmatpush.xpose.msra.mxu0 %v2359
        %2495 = vmatpush.xpose.msra.mxu0 %v2356
        %2496 = vmatpush.xpose.msra.mxu0 %v2353
        %2497 = vmatpush.xpose.msra.mxu0 %v2350
        %2498 = vmatpush.xpose.msra.mxu0 %v2347
        %2499 = vmatpush.xpose.msra.mxu0 %v2344
        %2500 = vmatpush.xpose.msra.mxu0 %v2341
        %2501 = vmatpush.xpose.msra.mxu0 %v2338
        %2502 = vmatmul.f32.gmra.mxu0 %v2254
        %v2503 = vpop.f32.mrf.mxu0
        %v2504 = vadd.f32 0.0, %v2503
        %2505 = vmatmul.f32.gmra.mxu0 %v2257
        %v2506 = vpop.f32.mrf.mxu0
        %v2507 = vadd.f32 0.0, %v2506
        %2508 = vmatmul.f32.gmra.mxu0 %v2260
        %v2509 = vpop.f32.mrf.mxu0
        %v2510 = vadd.f32 0.0, %v2509
        %2511 = vmatmul.f32.gmra.mxu0 %v2263
        %v2512 = vpop.f32.mrf.mxu0
        %v2513 = vadd.f32 0.0, %v2512
        %2514 = vmatmul.f32.gmra.mxu0 %v2266
        %v2515 = vpop.f32.mrf.mxu0
        %v2516 = vadd.f32 0.0, %v2515
        %2517 = vmatmul.f32.gmra.mxu0 %v2269
        %v2518 = vpop.f32.mrf.mxu0
        %v2519 = vadd.f32 0.0, %v2518
        %2520 = vmatmul.f32.gmra.mxu0 %v2272
        %v2521 = vpop.f32.mrf.mxu0
        %v2522 = vadd.f32 0.0, %v2521
        %2523 = vmatmul.f32.gmra.mxu0 %v2275
        %v2524 = vpop.f32.mrf.mxu0
        %v2525 = vadd.f32 0.0, %v2524
        %2526 = vmatmul.f32.gmra.mxu0 %v2278
        %v2527 = vpop.f32.mrf.mxu0
        %v2528 = vadd.f32 0.0, %v2527
        %2529 = vmatmul.f32.gmra.mxu0 %v2281
        %v2530 = vpop.f32.mrf.mxu0
        %v2531 = vadd.f32 0.0, %v2530
        %2532 = vmatmul.f32.gmra.mxu0 %v2284
        %v2533 = vpop.f32.mrf.mxu0
        %v2534 = vadd.f32 0.0, %v2533
        %2535 = vmatmul.f32.gmra.mxu0 %v2287
        %v2536 = vpop.f32.mrf.mxu0
        %v2537 = vadd.f32 0.0, %v2536
        %2538 = vdwg.mxu0
        %2539 = vmatpush.xpose.msra.mxu0 %v2431
        %2540 = vmatpush.xpose.msra.mxu0 %v2428
        %2541 = vmatpush.xpose.msra.mxu0 %v2425
        %2542 = vmatpush.xpose.msra.mxu0 %v2422
        %2543 = vmatpush.xpose.msra.mxu0 %v2419
        %2544 = vmatpush.xpose.msra.mxu0 %v2416
        %2545 = vmatpush.xpose.msra.mxu0 %v2413
        %2546 = vmatpush.xpose.msra.mxu0 %v2410
        %2547 = vmatpush.xpose.msra.mxu0 %v2407
        %2548 = vmatpush.xpose.msra.mxu0 %v2404
        %2549 = vmatpush.xpose.msra.mxu0 %v2401
        %2550 = vmatpush.xpose.msra.mxu0 %v2398
        %2551 = vmatpush.xpose.msra.mxu0 %v2395
        %2552 = vmatpush.xpose.msra.mxu0 %v2392
        %2553 = vmatpush.xpose.msra.mxu0 %v2389
        %2554 = vmatpush.xpose.msra.mxu0 %v2386
        %2555 = vmatmul.f32.gmra.mxu0 %v2254
        %v2556 = vpop.f32.mrf.mxu0
        %v2557 = vadd.f32 0.0, %v2556
        %2558 = vmatmul.f32.gmra.mxu0 %v2257
        %v2559 = vpop.f32.mrf.mxu0
        %v2560 = vadd.f32 0.0, %v2559
        %2561 = vmatmul.f32.gmra.mxu0 %v2260
        %v2562 = vpop.f32.mrf.mxu0
        %v2563 = vadd.f32 0.0, %v2562
        %2564 = vmatmul.f32.gmra.mxu0 %v2263
        %v2565 = vpop.f32.mrf.mxu0
        %v2566 = vadd.f32 0.0, %v2565
        %2567 = vmatmul.f32.gmra.mxu0 %v2266
        %v2568 = vpop.f32.mrf.mxu0
        %v2569 = vadd.f32 0.0, %v2568
        %2570 = vmatmul.f32.gmra.mxu0 %v2269
        %v2571 = vpop.f32.mrf.mxu0
        %v2572 = vadd.f32 0.0, %v2571
        %2573 = vmatmul.f32.gmra.mxu0 %v2272
        %v2574 = vpop.f32.mrf.mxu0
        %v2575 = vadd.f32 0.0, %v2574
        %2576 = vmatmul.f32.gmra.mxu0 %v2275
        %v2577 = vpop.f32.mrf.mxu0
        %v2578 = vadd.f32 0.0, %v2577
        %2579 = vmatmul.f32.gmra.mxu0 %v2278
        %v2580 = vpop.f32.mrf.mxu0
        %v2581 = vadd.f32 0.0, %v2580
        %2582 = vmatmul.f32.gmra.mxu0 %v2281
        %v2583 = vpop.f32.mrf.mxu0
        %v2584 = vadd.f32 0.0, %v2583
        %2585 = vmatmul.f32.gmra.mxu0 %v2284
        %v2586 = vpop.f32.mrf.mxu0
        %v2587 = vadd.f32 0.0, %v2586
        %2588 = vmatmul.f32.gmra.mxu0 %v2287
        %v2589 = vpop.f32.mrf.mxu0
        %v2590 = vadd.f32 0.0, %v2589
        %2591 = vdwg.mxu0
        %v2593 = vsel %vm896, %v596, 0
        %v2596 = vsel %vm896, %v597, 0
        %v2599 = vsel %vm896, %v598, 0
        %v2602 = vsel %vm896, %v599, 0
        %v2605 = vsel %vm896, %v600, 0
        %v2608 = vsel %vm896, %v601, 0
        %v2611 = vsel %vm896, %v602, 0
        %v2614 = vsel %vm896, %v603, 0
        %v2617 = vsel %vm896, %v604, 0
        %v2620 = vsel %vm896, %v605, 0
        %v2623 = vsel %vm896, %v606, 0
        %v2626 = vsel %vm896, %v607, 0
        %v2629 = vsel %vm896, %v848, 0
        %v2632 = vsel %vm896, %v849, 0
        %v2635 = vsel %vm896, %v850, 0
        %v2638 = vsel %vm896, %v851, 0
        %v2641 = vsel %vm896, %v852, 0
        %v2644 = vsel %vm896, %v853, 0
        %v2647 = vsel %vm896, %v854, 0
        %v2650 = vsel %vm896, %v855, 0
        %v2653 = vsel %vm896, %v856, 0
        %v2656 = vsel %vm896, %v857, 0
        %v2659 = vsel %vm896, %v858, 0
        %v2662 = vsel %vm896, %v859, 0
        %v2665 = vsel %vm896, %v860, 0
        %v2668 = vsel %vm896, %v861, 0
        %v2671 = vsel %vm896, %v862, 0
        %v2674 = vsel %vm896, %v863, 0
        %v2677 = vsel %vm896, %v864, 0
        %v2680 = vsel %vm896, %v865, 0
        %v2683 = vsel %vm896, %v866, 0
        %v2686 = vsel %vm896, %v867, 0
        %v2689 = vsel %vm896, %v868, 0
        %v2692 = vsel %vm896, %v869, 0
        %v2695 = vsel %vm896, %v870, 0
        %v2698 = vsel %vm896, %v871, 0
        %v2701 = vsel %vm896, %v872, 0
        %v2704 = vsel %vm896, %v873, 0
        %v2707 = vsel %vm896, %v874, 0
        %v2710 = vsel %vm896, %v875, 0
        %v2713 = vsel %vm896, %v876, 0
        %v2716 = vsel %vm896, %v877, 0
        %v2719 = vsel %vm896, %v878, 0
        %v2722 = vsel %vm896, %v879, 0
        %v2725 = vsel %vm896, %v880, 0
        %v2728 = vsel %vm896, %v881, 0
        %v2731 = vsel %vm896, %v882, 0
        %v2734 = vsel %vm896, %v883, 0
        %v2737 = vsel %vm896, %v884, 0
        %v2740 = vsel %vm896, %v885, 0
        %v2743 = vsel %vm896, %v886, 0
        %v2746 = vsel %vm896, %v887, 0
        %v2749 = vsel %vm896, %v888, 0
        %v2752 = vsel %vm896, %v889, 0
        %v2755 = vsel %vm896, %v890, 0
        %v2758 = vsel %vm896, %v891, 0
        %v2761 = vsel %vm896, %v892, 0
        %v2764 = vsel %vm896, %v893, 0
        %v2767 = vsel %vm896, %v894, 0
        %v2770 = vsel %vm896, %v895, 0
        %2772 = vmatpush.xpose.msra.mxu0 %v2674
        %2773 = vmatpush.xpose.msra.mxu0 %v2671
        %2774 = vmatpush.xpose.msra.mxu0 %v2668
        %2775 = vmatpush.xpose.msra.mxu0 %v2665
        %2776 = vmatpush.xpose.msra.mxu0 %v2662
        %2777 = vmatpush.xpose.msra.mxu0 %v2659
        %2778 = vmatpush.xpose.msra.mxu0 %v2656
        %2779 = vmatpush.xpose.msra.mxu0 %v2653
        %2780 = vmatpush.xpose.msra.mxu0 %v2650
        %2781 = vmatpush.xpose.msra.mxu0 %v2647
        %2782 = vmatpush.xpose.msra.mxu0 %v2644
        %2783 = vmatpush.xpose.msra.mxu0 %v2641
        %2784 = vmatpush.xpose.msra.mxu0 %v2638
        %2785 = vmatpush.xpose.msra.mxu0 %v2635
        %2786 = vmatpush.xpose.msra.mxu0 %v2632
        %2787 = vmatpush.xpose.msra.mxu0 %v2629
        %2788 = vmatmul.f32.gmra.mxu0 %v2593
        %v2789 = vpop.f32.mrf.mxu0
        %v2790 = vadd.f32 0.0, %v2789
        %2791 = vmatmul.f32.gmra.mxu0 %v2596
        %v2792 = vpop.f32.mrf.mxu0
        %v2793 = vadd.f32 0.0, %v2792
        %2794 = vmatmul.f32.gmra.mxu0 %v2599
        %v2795 = vpop.f32.mrf.mxu0
        %v2796 = vadd.f32 0.0, %v2795
        %2797 = vmatmul.f32.gmra.mxu0 %v2602
        %v2798 = vpop.f32.mrf.mxu0
        %v2799 = vadd.f32 0.0, %v2798
        %2800 = vmatmul.f32.gmra.mxu0 %v2605
        %v2801 = vpop.f32.mrf.mxu0
        %v2802 = vadd.f32 0.0, %v2801
        %2803 = vmatmul.f32.gmra.mxu0 %v2608
        %v2804 = vpop.f32.mrf.mxu0
        %v2805 = vadd.f32 0.0, %v2804
        %2806 = vmatmul.f32.gmra.mxu0 %v2611
        %v2807 = vpop.f32.mrf.mxu0
        %v2808 = vadd.f32 0.0, %v2807
        %2809 = vmatmul.f32.gmra.mxu0 %v2614
        %v2810 = vpop.f32.mrf.mxu0
        %v2811 = vadd.f32 0.0, %v2810
        %2812 = vmatmul.f32.gmra.mxu0 %v2617
        %v2813 = vpop.f32.mrf.mxu0
        %v2814 = vadd.f32 0.0, %v2813
        %2815 = vmatmul.f32.gmra.mxu0 %v2620
        %v2816 = vpop.f32.mrf.mxu0
        %v2817 = vadd.f32 0.0, %v2816
        %2818 = vmatmul.f32.gmra.mxu0 %v2623
        %v2819 = vpop.f32.mrf.mxu0
        %v2820 = vadd.f32 0.0, %v2819
        %2821 = vmatmul.f32.gmra.mxu0 %v2626
        %v2822 = vpop.f32.mrf.mxu0
        %v2823 = vadd.f32 0.0, %v2822
        %2824 = vdwg.mxu0
        %2825 = vmatpush.xpose.msra.mxu0 %v2722
        %2826 = vmatpush.xpose.msra.mxu0 %v2719
        %2827 = vmatpush.xpose.msra.mxu0 %v2716
        %2828 = vmatpush.xpose.msra.mxu0 %v2713
        %2829 = vmatpush.xpose.msra.mxu0 %v2710
        %2830 = vmatpush.xpose.msra.mxu0 %v2707
        %2831 = vmatpush.xpose.msra.mxu0 %v2704
        %2832 = vmatpush.xpose.msra.mxu0 %v2701
        %2833 = vmatpush.xpose.msra.mxu0 %v2698
        %2834 = vmatpush.xpose.msra.mxu0 %v2695
        %2835 = vmatpush.xpose.msra.mxu0 %v2692
        %2836 = vmatpush.xpose.msra.mxu0 %v2689
        %2837 = vmatpush.xpose.msra.mxu0 %v2686
        %2838 = vmatpush.xpose.msra.mxu0 %v2683
        %2839 = vmatpush.xpose.msra.mxu0 %v2680
        %2840 = vmatpush.xpose.msra.mxu0 %v2677
        %2841 = vmatmul.f32.gmra.mxu0 %v2593
        %v2842 = vpop.f32.mrf.mxu0
        %v2843 = vadd.f32 0.0, %v2842
        %2844 = vmatmul.f32.gmra.mxu0 %v2596
        %v2845 = vpop.f32.mrf.mxu0
        %v2846 = vadd.f32 0.0, %v2845
        %2847 = vmatmul.f32.gmra.mxu0 %v2599
        %v2848 = vpop.f32.mrf.mxu0
        %v2849 = vadd.f32 0.0, %v2848
        %2850 = vmatmul.f32.gmra.mxu0 %v2602
        %v2851 = vpop.f32.mrf.mxu0
        %v2852 = vadd.f32 0.0, %v2851
        %2853 = vmatmul.f32.gmra.mxu0 %v2605
        %v2854 = vpop.f32.mrf.mxu0
        %v2855 = vadd.f32 0.0, %v2854
        %2856 = vmatmul.f32.gmra.mxu0 %v2608
        %v2857 = vpop.f32.mrf.mxu0
        %v2858 = vadd.f32 0.0, %v2857
        %2859 = vmatmul.f32.gmra.mxu0 %v2611
        %v2860 = vpop.f32.mrf.mxu0
        %v2861 = vadd.f32 0.0, %v2860
        %2862 = vmatmul.f32.gmra.mxu0 %v2614
        %v2863 = vpop.f32.mrf.mxu0
        %v2864 = vadd.f32 0.0, %v2863
        %2865 = vmatmul.f32.gmra.mxu0 %v2617
        %v2866 = vpop.f32.mrf.mxu0
        %v2867 = vadd.f32 0.0, %v2866
        %2868 = vmatmul.f32.gmra.mxu0 %v2620
        %v2869 = vpop.f32.mrf.mxu0
        %v2870 = vadd.f32 0.0, %v2869
        %2871 = vmatmul.f32.gmra.mxu0 %v2623
        %v2872 = vpop.f32.mrf.mxu0
        %v2873 = vadd.f32 0.0, %v2872
        %2874 = vmatmul.f32.gmra.mxu0 %v2626
        %v2875 = vpop.f32.mrf.mxu0
        %v2876 = vadd.f32 0.0, %v2875
        %2877 = vdwg.mxu0
        %2878 = vmatpush.xpose.msra.mxu0 %v2770
        %2879 = vmatpush.xpose.msra.mxu0 %v2767
        %2880 = vmatpush.xpose.msra.mxu0 %v2764
        %2881 = vmatpush.xpose.msra.mxu0 %v2761
        %2882 = vmatpush.xpose.msra.mxu0 %v2758
        %2883 = vmatpush.xpose.msra.mxu0 %v2755
        %2884 = vmatpush.xpose.msra.mxu0 %v2752
        %2885 = vmatpush.xpose.msra.mxu0 %v2749
        %2886 = vmatpush.xpose.msra.mxu0 %v2746
        %2887 = vmatpush.xpose.msra.mxu0 %v2743
        %2888 = vmatpush.xpose.msra.mxu0 %v2740
        %2889 = vmatpush.xpose.msra.mxu0 %v2737
        %2890 = vmatpush.xpose.msra.mxu0 %v2734
        %2891 = vmatpush.xpose.msra.mxu0 %v2731
        %2892 = vmatpush.xpose.msra.mxu0 %v2728
        %2893 = vmatpush.xpose.msra.mxu0 %v2725
        %2894 = vmatmul.f32.gmra.mxu0 %v2593
        %v2895 = vpop.f32.mrf.mxu0
        %v2896 = vadd.f32 0.0, %v2895
        %2897 = vmatmul.f32.gmra.mxu0 %v2596
        %v2898 = vpop.f32.mrf.mxu0
        %v2899 = vadd.f32 0.0, %v2898
        %2900 = vmatmul.f32.gmra.mxu0 %v2599
        %v2901 = vpop.f32.mrf.mxu0
        %v2902 = vadd.f32 0.0, %v2901
        %2903 = vmatmul.f32.gmra.mxu0 %v2602
        %v2904 = vpop.f32.mrf.mxu0
        %v2905 = vadd.f32 0.0, %v2904
        %2906 = vmatmul.f32.gmra.mxu0 %v2605
        %v2907 = vpop.f32.mrf.mxu0
        %v2908 = vadd.f32 0.0, %v2907
        %2909 = vmatmul.f32.gmra.mxu0 %v2608
        %v2910 = vpop.f32.mrf.mxu0
        %v2911 = vadd.f32 0.0, %v2910
        %2912 = vmatmul.f32.gmra.mxu0 %v2611
        %v2913 = vpop.f32.mrf.mxu0
        %v2914 = vadd.f32 0.0, %v2913
        %2915 = vmatmul.f32.gmra.mxu0 %v2614
        %v2916 = vpop.f32.mrf.mxu0
        %v2917 = vadd.f32 0.0, %v2916
        %2918 = vmatmul.f32.gmra.mxu0 %v2617
        %v2919 = vpop.f32.mrf.mxu0
        %v2920 = vadd.f32 0.0, %v2919
        %2921 = vmatmul.f32.gmra.mxu0 %v2620
        %v2922 = vpop.f32.mrf.mxu0
        %v2923 = vadd.f32 0.0, %v2922
        %2924 = vmatmul.f32.gmra.mxu0 %v2623
        %v2925 = vpop.f32.mrf.mxu0
        %v2926 = vadd.f32 0.0, %v2925
        %2927 = vmatmul.f32.gmra.mxu0 %v2626
        %v2928 = vpop.f32.mrf.mxu0
        %v2929 = vadd.f32 0.0, %v2928
        %2930 = vdwg.mxu0
        %2931 = vst [vmem:[%s518] sm:$0xff] %v1095
        %2932 = vst [vmem:[%s518 + $0x8] sm:$0xff] %v1148
        %2933 = vst [vmem:[%s518 + $0x10] sm:$0xff] %v1201
        %2934 = vst [vmem:[%s518 + $0x18] sm:$0xff] %v1098
        %2935 = vst [vmem:[%s518 + $0x20] sm:$0xff] %v1151
        %2936 = vst [vmem:[%s518 + $0x28] sm:$0xff] %v1204
        %2937 = vst [vmem:[%s518 + $0x30] sm:$0xff] %v1101
        %2938 = vst [vmem:[%s518 + $0x38] sm:$0xff] %v1154
        %2939 = vst [vmem:[%s518 + $0x40] sm:$0xff] %v1207
        %2940 = vst [vmem:[%s518 + $0x48] sm:$0xff] %v1104
        %2941 = vst [vmem:[%s518 + $0x50] sm:$0xff] %v1157
        %2942 = vst [vmem:[%s518 + $0x58] sm:$0xff] %v1210
        %2943 = vst [vmem:[%s518 + $0x60] sm:$0xff] %v1107
        %2944 = vst [vmem:[%s518 + $0x68] sm:$0xff] %v1160
        %2945 = vst [vmem:[%s518 + $0x70] sm:$0xff] %v1213
        %2946 = vst [vmem:[%s518 + $0x78] sm:$0xff] %v1110
        %2947 = vst [vmem:[%s518 + $0x80] sm:$0xff] %v1163
        %2948 = vst [vmem:[%s518 + $0x88] sm:$0xff] %v1216
        %2949 = vst [vmem:[%s518 + $0x90] sm:$0xff] %v1113
        %2950 = vst [vmem:[%s518 + $0x98] sm:$0xff] %v1166
        %2951 = vst [vmem:[%s518 + $0xa0] sm:$0xff] %v1219
        %2952 = vst [vmem:[%s518 + $0xa8] sm:$0xff] %v1116
        %2953 = vst [vmem:[%s518 + $0xb0] sm:$0xff] %v1169
        %2954 = vst [vmem:[%s518 + $0xb8] sm:$0xff] %v1222
        %2955 = vst [vmem:[%s518 + $0xc0] sm:$0xff] %v1119
        %2956 = vst [vmem:[%s518 + $0xc8] sm:$0xff] %v1172
        %2957 = vst [vmem:[%s518 + $0xd0] sm:$0xff] %v1225
        %2958 = vst [vmem:[%s518 + $0xd8] sm:$0xff] %v1122
        %2959 = vst [vmem:[%s518 + $0xe0] sm:$0xff] %v1175
        %2960 = vst [vmem:[%s518 + $0xe8] sm:$0xff] %v1228
        %2961 = vst [vmem:[%s518 + $0xf0] sm:$0xff] %v1125
        %2962 = vst [vmem:[%s518 + $0xf8] sm:$0xff] %v1178
        %2963 = vst [vmem:[%s518 + $0x100] sm:$0xff] %v1231
        %2964 = vst [vmem:[%s518 + $0x108] sm:$0xff] %v1128
        %2965 = vst [vmem:[%s518 + $0x110] sm:$0xff] %v1181
        %2966 = vst [vmem:[%s518 + $0x118] sm:$0xff] %v1234
        %2967 = vst [vmem:[%s518 + $0x120] sm:$0xff] %v1434
        %2968 = vst [vmem:[%s518 + $0x128] sm:$0xff] %v1487
        %2969 = vst [vmem:[%s518 + $0x130] sm:$0xff] %v1540
        %2970 = vst [vmem:[%s518 + $0x138] sm:$0xff] %v1437
        %2971 = vst [vmem:[%s518 + $0x140] sm:$0xff] %v1490
        %2972 = vst [vmem:[%s518 + $0x148] sm:$0xff] %v1543
        %2973 = vst [vmem:[%s518 + $0x150] sm:$0xff] %v1440
        %2974 = vst [vmem:[%s518 + $0x158] sm:$0xff] %v1493
        %2975 = vst [vmem:[%s518 + $0x160] sm:$0xff] %v1546
        %2976 = vst [vmem:[%s518 + $0x168] sm:$0xff] %v1443
        %2977 = vst [vmem:[%s518 + $0x170] sm:$0xff] %v1496
        %2978 = vst [vmem:[%s518 + $0x178] sm:$0xff] %v1549
        %2979 = vst [vmem:[%s518 + $0x180] sm:$0xff] %v1446
        %2980 = vst [vmem:[%s518 + $0x188] sm:$0xff] %v1499
        %2981 = vst [vmem:[%s518 + $0x190] sm:$0xff] %v1552
        %2982 = vst [vmem:[%s518 + $0x198] sm:$0xff] %v1449
        %2983 = vst [vmem:[%s518 + $0x1a0] sm:$0xff] %v1502
        %2984 = vst [vmem:[%s518 + $0x1a8] sm:$0xff] %v1555
        %2985 = vst [vmem:[%s518 + $0x1b0] sm:$0xff] %v1452
        %2986 = vst [vmem:[%s518 + $0x1b8] sm:$0xff] %v1505
        %2987 = vst [vmem:[%s518 + $0x1c0] sm:$0xff] %v1558
        %2988 = vst [vmem:[%s518 + $0x1c8] sm:$0xff] %v1455
        %2989 = vst [vmem:[%s518 + $0x1d0] sm:$0xff] %v1508
        %2990 = vst [vmem:[%s518 + $0x1d8] sm:$0xff] %v1561
        %2991 = vst [vmem:[%s518 + $0x1e0] sm:$0xff] %v1458
        %2992 = vst [vmem:[%s518 + $0x1e8] sm:$0xff] %v1511
        %2993 = vst [vmem:[%s518 + $0x1f0] sm:$0xff] %v1564
        %2994 = vst [vmem:[%s518 + $0x1f8] sm:$0xff] %v1461
        %2995 = vst [vmem:[%s518 + $0x200] sm:$0xff] %v1514
        %2996 = vst [vmem:[%s518 + $0x208] sm:$0xff] %v1567
        %2997 = vst [vmem:[%s518 + $0x210] sm:$0xff] %v1464
        %2998 = vst [vmem:[%s518 + $0x218] sm:$0xff] %v1517
        %2999 = vst [vmem:[%s518 + $0x220] sm:$0xff] %v1570
        %3000 = vst [vmem:[%s518 + $0x228] sm:$0xff] %v1467
        %3001 = vst [vmem:[%s518 + $0x230] sm:$0xff] %v1520
        %3002 = vst [vmem:[%s518 + $0x238] sm:$0xff] %v1573
        %3003 = vst [vmem:[%s518 + $0x240] sm:$0xff] %v1773
        %3004 = vst [vmem:[%s518 + $0x248] sm:$0xff] %v1826
        %3005 = vst [vmem:[%s518 + $0x250] sm:$0xff] %v1879
        %3006 = vst [vmem:[%s518 + $0x258] sm:$0xff] %v1776
        %3007 = vst [vmem:[%s518 + $0x260] sm:$0xff] %v1829
        %3008 = vst [vmem:[%s518 + $0x268] sm:$0xff] %v1882
        %3009 = vst [vmem:[%s518 + $0x270] sm:$0xff] %v1779
        %3010 = vst [vmem:[%s518 + $0x278] sm:$0xff] %v1832
        %3011 = vst [vmem:[%s518 + $0x280] sm:$0xff] %v1885
        %3012 = vst [vmem:[%s518 + $0x288] sm:$0xff] %v1782
        %3013 = vst [vmem:[%s518 + $0x290] sm:$0xff] %v1835
        %3014 = vst [vmem:[%s518 + $0x298] sm:$0xff] %v1888
        %3015 = vst [vmem:[%s518 + $0x2a0] sm:$0xff] %v1785
        %3016 = vst [vmem:[%s518 + $0x2a8] sm:$0xff] %v1838
        %3017 = vst [vmem:[%s518 + $0x2b0] sm:$0xff] %v1891
        %3018 = vst [vmem:[%s518 + $0x2b8] sm:$0xff] %v1788
        %3019 = vst [vmem:[%s518 + $0x2c0] sm:$0xff] %v1841
        %3020 = vst [vmem:[%s518 + $0x2c8] sm:$0xff] %v1894
        %3021 = vst [vmem:[%s518 + $0x2d0] sm:$0xff] %v1791
        %3022 = vst [vmem:[%s518 + $0x2d8] sm:$0xff] %v1844
        %3023 = vst [vmem:[%s518 + $0x2e0] sm:$0xff] %v1897
        %3024 = vst [vmem:[%s518 + $0x2e8] sm:$0xff] %v1794
        %3025 = vst [vmem:[%s518 + $0x2f0] sm:$0xff] %v1847
        %3026 = vst [vmem:[%s518 + $0x2f8] sm:$0xff] %v1900
        %3027 = vst [vmem:[%s518 + $0x300] sm:$0xff] %v1797
        %3028 = vst [vmem:[%s518 + $0x308] sm:$0xff] %v1850
        %3029 = vst [vmem:[%s518 + $0x310] sm:$0xff] %v1903
        %3030 = vst [vmem:[%s518 + $0x318] sm:$0xff] %v1800
        %3031 = vst [vmem:[%s518 + $0x320] sm:$0xff] %v1853
        %3032 = vst [vmem:[%s518 + $0x328] sm:$0xff] %v1906
        %3033 = vst [vmem:[%s518 + $0x330] sm:$0xff] %v1803
        %3034 = vst [vmem:[%s518 + $0x338] sm:$0xff] %v1856
        %3035 = vst [vmem:[%s518 + $0x340] sm:$0xff] %v1909
        %3036 = vst [vmem:[%s518 + $0x348] sm:$0xff] %v1806
        %3037 = vst [vmem:[%s518 + $0x350] sm:$0xff] %v1859
        %3038 = vst [vmem:[%s518 + $0x358] sm:$0xff] %v1912
        %3039 = vst [vmem:[%s518 + $0x360] sm:$0xff] %v2112
        %3040 = vst [vmem:[%s518 + $0x368] sm:$0xff] %v2165
        %3041 = vst [vmem:[%s518 + $0x370] sm:$0xff] %v2218
        %3042 = vst [vmem:[%s518 + $0x378] sm:$0xff] %v2115
        %3043 = vst [vmem:[%s518 + $0x380] sm:$0xff] %v2168
        %3044 = vst [vmem:[%s518 + $0x388] sm:$0xff] %v2221
        %3045 = vst [vmem:[%s518 + $0x390] sm:$0xff] %v2118
        %3046 = vst [vmem:[%s518 + $0x398] sm:$0xff] %v2171
        %3047 = vst [vmem:[%s518 + $0x3a0] sm:$0xff] %v2224
        %3048 = vst [vmem:[%s518 + $0x3a8] sm:$0xff] %v2121
        %3049 = vst [vmem:[%s518 + $0x3b0] sm:$0xff] %v2174
        %3050 = vst [vmem:[%s518 + $0x3b8] sm:$0xff] %v2227
        %3051 = vst [vmem:[%s518 + $0x3c0] sm:$0xff] %v2124
        %3052 = vst [vmem:[%s518 + $0x3c8] sm:$0xff] %v2177
        %3053 = vst [vmem:[%s518 + $0x3d0] sm:$0xff] %v2230
        %3054 = vst [vmem:[%s518 + $0x3d8] sm:$0xff] %v2127
        %3055 = vst [vmem:[%s518 + $0x3e0] sm:$0xff] %v2180
        %3056 = vst [vmem:[%s518 + $0x3e8] sm:$0xff] %v2233
        %3057 = vst [vmem:[%s518 + $0x3f0] sm:$0xff] %v2130
        %3058 = vst [vmem:[%s518 + $0x3f8] sm:$0xff] %v2183
        %3059 = vst [vmem:[%s518 + $0x400] sm:$0xff] %v2236
        %3060 = vst [vmem:[%s518 + $0x408] sm:$0xff] %v2133
        %3061 = vst [vmem:[%s518 + $0x410] sm:$0xff] %v2186
        %3062 = vst [vmem:[%s518 + $0x418] sm:$0xff] %v2239
        %3063 = vst [vmem:[%s518 + $0x420] sm:$0xff] %v2136
        %3064 = vst [vmem:[%s518 + $0x428] sm:$0xff] %v2189
        %3065 = vst [vmem:[%s518 + $0x430] sm:$0xff] %v2242
        %3066 = vst [vmem:[%s518 + $0x438] sm:$0xff] %v2139
        %3067 = vst [vmem:[%s518 + $0x440] sm:$0xff] %v2192
        %3068 = vst [vmem:[%s518 + $0x448] sm:$0xff] %v2245
        %3069 = vst [vmem:[%s518 + $0x450] sm:$0xff] %v2142
        %3070 = vst [vmem:[%s518 + $0x458] sm:$0xff] %v2195
        %3071 = vst [vmem:[%s518 + $0x460] sm:$0xff] %v2248
        %3072 = vst [vmem:[%s518 + $0x468] sm:$0xff] %v2145
        %3073 = vst [vmem:[%s518 + $0x470] sm:$0xff] %v2198
        %3074 = vst [vmem:[%s518 + $0x478] sm:$0xff] %v2251
        %3075 = vst [vmem:[%s518 + $0x480] sm:$0xff] %v2451
        %3076 = vst [vmem:[%s518 + $0x488] sm:$0xff] %v2504
        %3077 = vst [vmem:[%s518 + $0x490] sm:$0xff] %v2557
        %3078 = vst [vmem:[%s518 + $0x498] sm:$0xff] %v2454
        %3079 = vst [vmem:[%s518 + $0x4a0] sm:$0xff] %v2507
        %3080 = vst [vmem:[%s518 + $0x4a8] sm:$0xff] %v2560
        %3081 = vst [vmem:[%s518 + $0x4b0] sm:$0xff] %v2457
        %3082 = vst [vmem:[%s518 + $0x4b8] sm:$0xff] %v2510
        %3083 = vst [vmem:[%s518 + $0x4c0] sm:$0xff] %v2563
        %3084 = vst [vmem:[%s518 + $0x4c8] sm:$0xff] %v2460
        %3085 = vst [vmem:[%s518 + $0x4d0] sm:$0xff] %v2513
        %3086 = vst [vmem:[%s518 + $0x4d8] sm:$0xff] %v2566
        %3087 = vst [vmem:[%s518 + $0x4e0] sm:$0xff] %v2463
        %3088 = vst [vmem:[%s518 + $0x4e8] sm:$0xff] %v2516
        %3089 = vst [vmem:[%s518 + $0x4f0] sm:$0xff] %v2569
        %3090 = vst [vmem:[%s518 + $0x4f8] sm:$0xff] %v2466
        %3091 = vst [vmem:[%s518 + $0x500] sm:$0xff] %v2519
        %3092 = vst [vmem:[%s518 + $0x508] sm:$0xff] %v2572
        %3093 = vst [vmem:[%s518 + $0x510] sm:$0xff] %v2469
        %3094 = vst [vmem:[%s518 + $0x518] sm:$0xff] %v2522
        %3095 = vst [vmem:[%s518 + $0x520] sm:$0xff] %v2575
        %3096 = vst [vmem:[%s518 + $0x528] sm:$0xff] %v2472
        %3097 = vst [vmem:[%s518 + $0x530] sm:$0xff] %v2525
        %3098 = vst [vmem:[%s518 + $0x538] sm:$0xff] %v2578
        %3099 = vst [vmem:[%s518 + $0x540] sm:$0xff] %v2475
        %3100 = vst [vmem:[%s518 + $0x548] sm:$0xff] %v2528
        %3101 = vst [vmem:[%s518 + $0x550] sm:$0xff] %v2581
        %3102 = vst [vmem:[%s518 + $0x558] sm:$0xff] %v2478
        %3103 = vst [vmem:[%s518 + $0x560] sm:$0xff] %v2531
        %3104 = vst [vmem:[%s518 + $0x568] sm:$0xff] %v2584
        %3105 = vst [vmem:[%s518 + $0x570] sm:$0xff] %v2481
        %3106 = vst [vmem:[%s518 + $0x578] sm:$0xff] %v2534
        %3107 = vst [vmem:[%s518 + $0x580] sm:$0xff] %v2587
        %3108 = vst [vmem:[%s518 + $0x588] sm:$0xff] %v2484
        %3109 = vst [vmem:[%s518 + $0x590] sm:$0xff] %v2537
        %3110 = vst [vmem:[%s518 + $0x598] sm:$0xff] %v2590
        %3111 = vst [vmem:[%s518 + $0x5a0] sm:$0xff] %v2790
        %3112 = vst [vmem:[%s518 + $0x5a8] sm:$0xff] %v2843
        %3113 = vst [vmem:[%s518 + $0x5b0] sm:$0xff] %v2896
        %3114 = vst [vmem:[%s518 + $0x5b8] sm:$0xff] %v2793
        %3115 = vst [vmem:[%s518 + $0x5c0] sm:$0xff] %v2846
        %3116 = vst [vmem:[%s518 + $0x5c8] sm:$0xff] %v2899
        %3117 = vst [vmem:[%s518 + $0x5d0] sm:$0xff] %v2796
        %3118 = vst [vmem:[%s518 + $0x5d8] sm:$0xff] %v2849
        %3119 = vst [vmem:[%s518 + $0x5e0] sm:$0xff] %v2902
        %3120 = vst [vmem:[%s518 + $0x5e8] sm:$0xff] %v2799
        %3121 = vst [vmem:[%s518 + $0x5f0] sm:$0xff] %v2852
        %3122 = vst [vmem:[%s518 + $0x5f8] sm:$0xff] %v2905
        %3123 = vst [vmem:[%s518 + $0x600] sm:$0xff] %v2802
        %3124 = vst [vmem:[%s518 + $0x608] sm:$0xff] %v2855
        %3125 = vst [vmem:[%s518 + $0x610] sm:$0xff] %v2908
        %3126 = vst [vmem:[%s518 + $0x618] sm:$0xff] %v2805
        %3127 = vst [vmem:[%s518 + $0x620] sm:$0xff] %v2858
        %3128 = vst [vmem:[%s518 + $0x628] sm:$0xff] %v2911
        %3129 = vst [vmem:[%s518 + $0x630] sm:$0xff] %v2808
        %3130 = vst [vmem:[%s518 + $0x638] sm:$0xff] %v2861
        %3131 = vst [vmem:[%s518 + $0x640] sm:$0xff] %v2914
        %3132 = vst [vmem:[%s518 + $0x648] sm:$0xff] %v2811
        %3133 = vst [vmem:[%s518 + $0x650] sm:$0xff] %v2864
        %3134 = vst [vmem:[%s518 + $0x658] sm:$0xff] %v2917
        %3135 = vst [vmem:[%s518 + $0x660] sm:$0xff] %v2814
        %3136 = vst [vmem:[%s518 + $0x668] sm:$0xff] %v2867
        %3137 = vst [vmem:[%s518 + $0x670] sm:$0xff] %v2920
        %3138 = vst [vmem:[%s518 + $0x678] sm:$0xff] %v2817
        %3139 = vst [vmem:[%s518 + $0x680] sm:$0xff] %v2870
        %3140 = vst [vmem:[%s518 + $0x688] sm:$0xff] %v2923
        %3141 = vst [vmem:[%s518 + $0x690] sm:$0xff] %v2820
        %3142 = vst [vmem:[%s518 + $0x698] sm:$0xff] %v2873
        %3143 = vst [vmem:[%s518 + $0x6a0] sm:$0xff] %v2926
        %3144 = vst [vmem:[%s518 + $0x6a8] sm:$0xff] %v2823
        %3145 = vst [vmem:[%s518 + $0x6b0] sm:$0xff] %v2876
        %3146 = vst [vmem:[%s518 + $0x6b8] sm:$0xff] %v2929
        %s3147 = sand.u32 %s103, 1
        %s3148 = scalar_lea.sflag [#allocation4], %s3147
        %s3149 = sand.u32 %s103, 1
        %s3150 = smul.addr %s3149, 1728
        %s3151 = scalar_lea.vmem [#allocation3], %s3150
        // Predicated region
        $region67: #{tpu_custom_call.1} parent=61 // pred_check
          %p3152 = pneg %p113
        $region68: #{tpu_custom_call.1} parent=61 // pred_check_branch
          %3154 = sbr.rel (%p3152) target = $region70
        $region69: #{tpu_custom_call.1} parent=61 // pred_region
          #allocation6 [shape = 'u32[6]{0}', space=smem, size = 0x18, scoped, tag = 'DMA stride descriptor']
          %s3155 = smul.u32 6, %s21
          %s3156 = smul.u32 12, %s23
          %s3157 = smul.u32 3, %s22
          %3159 = vsyncadd %s3148, 0
          %s3160 = smul.addr %s3156, 3
          %s3161 = sadd.s32 %s3157, %s3160
          %s3162 = smul.addr %s3155, 144
          %s3163 = sadd.s32 %s3161, %s3162
          %s3164 = smul.addr %s3163, 8
          %s3165 = scalar_lea.hbm %s2, %s3164
          %s3167 = sshll.u32 1, 14
          %s3168 = sxor.u32 4294967295, %s3167
          %s3171 = sshll.u32 7, 18
          %s3172 = sxor.u32 4294967295, %s3171
          %s3173 = sand.u32 0, %s3172
          %s3175 = sor.u32 %s3173, 0
          %s3176 = sshll.u32 %s3151, 4
          %s3177 = int_to_ptr.vmem [resolvable:$true] %s3176
          %s3178 = sshll.u32 %s3165, 4
          %s3179 = int_to_ptr.hbm [resolvable:$true] %s3178
          %3185 = sst [smem:[#allocation6]] 4608
          %s3186 = scalar_lea.smem [#allocation6], 1
          %3187 = sst [smem:[%s3186]] 18432
          %s3188 = scalar_lea.smem [#allocation6], 2
          %3189 = sst [smem:[%s3188]] 12
          %s3190 = scalar_lea.smem [#allocation6], 3
          %3191 = sst [smem:[%s3190]] 384
          %s3192 = scalar_lea.smem [#allocation6], 4
          %3193 = sst [smem:[%s3192]] 384
          %s3194 = scalar_lea.smem [#allocation6], 5
          %3195 = sst [smem:[%s3194]] 24
          %3197 = dma.general %s3177, 27648, %s3179, %s3148, [#allocation5], [#allocation6], %s3175, 0
        $region70: #{tpu_custom_call.1} parent=61 // pred_fallthru
          _
      $region62: #{tpu_custom_call.1} parent=5 // pred_fallthru
        _
      %p3198 = scmp.le.s32.totalorder 2, %s11
      // Predicated region
      $region71: #{tpu_custom_call.1} parent=5 // pred_check
        %p3199 = pneg %p3198
      $region72: #{tpu_custom_call.1} parent=5 // pred_check_branch
        %3201 = sbr.rel (%p3199) target = $region74
      $region73: #{tpu_custom_call.1} parent=5 // pred_region
        %s3202 = ssub.s32 %s11, 2
        // Predicated region
        $region75: #{tpu_custom_call.1} parent=73 // pred_check
          %p3203 = pneg %p119
        $region76: #{tpu_custom_call.1} parent=73 // pred_check_branch
          %3205 = sbr.rel (%p3203) target = $region78
        $region77: #{tpu_custom_call.1} parent=73 // pred_region
          %s3206 = sand.u32 %s104, 1
          %s3207 = scalar_lea.sflag [#allocation4], %s3206
          %s3208 = sand.u32 %s104, 1
          %s3209 = smul.addr %s3208, 1728
          %s3210 = scalar_lea.vmem [#allocation3], %s3209
          %3212 = dma.done %s3207, 27648
        $region78: #{tpu_custom_call.1} parent=73 // pred_fallthru
          _
      $region74: #{tpu_custom_call.1} parent=5 // pred_fallthru
        _
    $region6: #{tpu_custom_call.1} parent=1 // loop_footer
      %s15 = sadd.s32 1, %s11
    $region7: #{tpu_custom_call.1} parent=1 // loop_footer_branch
      %10 = sbr.rel target = $region3
    $region8: #{tpu_custom_call.1} parent=1 // loop_exit
      _
    %3213 = vsyncpa [#allocation4], 1
    %s3214 = scalar_lea.sflag [#allocation4], 1
    %3215 = vsyncpa %s3214, 1

</llo_original>
